<compile_context>
chip_gen: v6e
topology: v6e:2x2x1
jax: 0.10.0
libtpu: 0.0.40
codegen_flags: <defaults>
</compile_context>

<pallas_src>
import jax
import jax.numpy as jnp
from jax import lax
from jax.experimental import pallas as pl
from jax.experimental.pallas import tpu as pltpu

# ---- LIF default parameters (norse LIFParameters defaults) ----
TAU_SYN_INV = 1.0 / 5e-3     # 200.0
TAU_MEM_INV = 1.0 / 1e-2     # 100.0
V_LEAK = 0.0
V_TH = 1.0
V_RESET = 0.0
DT = 1e-3

# Folded integration constants (exactly equivalent to norse lif_step algebra).
ALPHA_V = 1.0 - DT * TAU_MEM_INV       # v decay               (0.9)
BETA_V = DT * TAU_MEM_INV              # i -> v coupling       (0.1)
GAMMA_V = DT * TAU_MEM_INV * V_LEAK    # leak drive            (0.0 here)
ALPHA_I = 1.0 - DT * TAU_SYN_INV       # i decay               (0.8)


def _round_up(n, m):
    return ((n + m - 1) // m) * m


def _pick_divisor(n, cap, multiple):
    """Largest divisor of n that is <= cap and a multiple of `multiple`;
    falls back to n (single block) if none exists."""
    for d in range(min(n, cap), 0, -1):
        if n % d == 0 and d % multiple == 0:
            return d
    return n


def _make_kernel(ts, bb, in_size, hp, t_total, needs_mask, unroll):
    """Kernel for a fixed (time-block, batch-block) tile and padded sizes."""

    def kernel(x_ref, w_in_ref, w_rec_ref,
               out_ref, zf_ref, vf_ref, if_ref, xproj_sc):
        t_blk = pl.program_id(1)

        # Zero-state fallback at the first time block of each batch block
        # (norse state_fallback). State is carried across time blocks in the
        # VMEM-resident zf/vf/if output blocks (constant index_map over t).
        @pl.when(t_blk == 0)
        def _():
            zf_ref[...] = jnp.zeros_like(zf_ref)
            vf_ref[...] = jnp.zeros_like(vf_ref)
            if_ref[...] = jnp.zeros_like(if_ref)

        # Hoisted input projection: one big (ts*bb, IN) x (IN, Hp) bf16 dot
        # per grid step (f32 accumulation), off the serial recurrence chain.
        x_blk = x_ref[...].reshape(ts * bb, in_size).astype(jnp.bfloat16)
        xproj_sc[...] = jnp.dot(x_blk, w_in_ref[...],
                                preferred_element_type=jnp.float32)

        w_rec = w_rec_ref[...]           # (Hp, Hp) bf16, loaded once per step

        # State carried in vregs through the timestep loop.
        z0 = zf_ref[...].astype(jnp.bfloat16)
        v0 = vf_ref[...]
        i0 = if_ref[...]

        t0 = t_blk * ts

        def step(s, carry):
            z_bf, v, i = carry
            # LIF decay with folded constants (== norse lif_step).
            v_dec = ALPHA_V * v + BETA_V * i
            if GAMMA_V != 0.0:
                v_dec = v_dec + GAMMA_V
            i_dec = ALPHA_I * i
            # Threshold (strict >, heaviside forward) and reset (V_RESET=0).
            spike = v_dec > V_TH
            z_new = spike.astype(jnp.bfloat16)
            v_new = jnp.where(spike, V_RESET, v_dec)
            # Recurrent contribution uses the PREVIOUS timestep's spikes.
            rec = jnp.dot(z_bf, w_rec, preferred_element_type=jnp.float32)
            row = pl.multiple_of(s * bb, bb)
            i_new = i_dec + xproj_sc[pl.ds(row, bb), :] + rec
            # Per-timestep spike output (bf16, full-lane store).
            out_ref[s] = z_new
            if needs_mask:
                # Ragged last time block: freeze state on padded timesteps
                # (padded spike rows are sliced off in the wrapper).
                valid = (t0 + s) < t_total
                z_new = jnp.where(valid, z_new, z_bf)
                v_new = jnp.where(valid, v_new, v)
                i_new = jnp.where(valid, i_new, i)
            return (z_new, v_new, i_new)

        z_l, v_l, i_l = lax.fori_loop(0, ts, step, (z0, v0, i0),
                                      unroll=unroll)

        # Single state writeback per grid step (was per timestep).
        zf_ref[...] = z_l.astype(jnp.float32)
        vf_ref[...] = v_l
        if_ref[...] = i_l

    return kernel


def snn_recurrent_forward(x, input_weights, recurrent_weights, *,
                          autapses=False, time_block=64, batch_block=None,
                          unroll=8):
    """Forward pass of norse SNNRecurrent with a recurrent LIF activation.

    x:                 (T, B, input_size) float32, time-major.
    input_weights:     (hidden, input_size) torch F.linear layout.
    recurrent_weights: (hidden, hidden)     torch F.linear layout.

    Returns (spikes (T, B, hidden) f32, final state (z, v, i)).
    """
    T, B, IN = x.shape
    H = input_weights.shape[0]

    # autapses=False -> zero the recurrent diagonal (module does this at init).
    if not autapses:
        recurrent_weights = recurrent_weights * (
            1.0 - jnp.eye(H, dtype=recurrent_weights.dtype))

    # Lane-dense hidden dim and sublane-aligned batch. Padded weight rows/cols
    # are zero, so padded state columns stay exactly 0 and never spike.
    Hp = _round_up(H, 128)
    Bp = _round_up(B, 8)

    w_in_t = (jnp.zeros((IN, Hp), jnp.float32)
              .at[:, :H].set(jnp.transpose(input_weights))
              .astype(jnp.bfloat16))
    w_rec_t = (jnp.zeros((Hp, Hp), jnp.float32)
               .at[:H, :H].set(jnp.transpose(recurrent_weights))
               .astype(jnp.bfloat16))

    # Time blocking: pad T to a multiple of ts and mask the ragged tail
    # in-kernel instead of degrading ts toward 1 for awkward T.
    ts = max(1, min(time_block, T))
    Tp = _round_up(T, ts)
    needs_mask = Tp != T

    # Batch blocking (optional "parallel" grid axis, e.g. for v7x's 2 TCs).
    # Blocks must be a multiple of 16 sublanes (bf16 spike output tiling) or
    # cover the full batch dim.
    if batch_block is None:
        bb = Bp
    else:
        bb = _pick_divisor(Bp, max(batch_block, 16), 16)

    x_in = x
    if Tp != T or Bp != B:
        x_in = jnp.zeros((Tp, Bp, IN), x.dtype).at[:T, :B, :].set(x)

    nb = Bp // bb
    nt = Tp // ts
    unroll_k = max(1, min(unroll, ts))

    out_shapes = (
        jax.ShapeDtypeStruct((Tp, Bp, Hp), jnp.bfloat16),   # spikes (bf16)
        jax.ShapeDtypeStruct((Bp, Hp), jnp.float32),        # final z
        jax.ShapeDtypeStruct((Bp, Hp), jnp.float32),        # final v
        jax.ShapeDtypeStruct((Bp, Hp), jnp.float32),        # final i
    )

    # VMEM budget: x + spike double buffers, weights, resident state, scratch.
    est = (2 * ts * bb * IN * 4
           + 2 * ts * bb * Hp * 2
           + 2 * (IN * Hp + Hp * Hp) * 2
           + 2 * 3 * bb * Hp * 4
           + ts * bb * Hp * 4)
    vmem_limit = int(min(64 * 2**20, max(32 * 2**20, 2 * est)))

    grid_spec = pltpu.PrefetchScalarGridSpec(
        num_scalar_prefetch=0,
        grid=(nb, nt),
        in_specs=[
            pl.BlockSpec((ts, bb, IN), lambda b, t: (t, b, 0)),  # x time-slab
            pl.BlockSpec((IN, Hp), lambda b, t: (0, 0)),         # W_in^T (resident)
            pl.BlockSpec((Hp, Hp), lambda b, t: (0, 0)),         # W_rec^T (resident)
        ],
        out_specs=[
            pl.BlockSpec((ts, bb, Hp), lambda b, t: (t, b, 0)),  # spike slab
            pl.BlockSpec((bb, Hp), lambda b, t: (b, 0)),         # final z (resident over t)
            pl.BlockSpec((bb, Hp), lambda b, t: (b, 0)),         # final v
            pl.BlockSpec((bb, Hp), lambda b, t: (b, 0)),         # final i
        ],
        scratch_shapes=[
            pltpu.VMEM((ts * bb, Hp), jnp.float32),              # hoisted x projection
        ],
    )

    spikes, z_f, v_f, i_f = pl.pallas_call(
        _make_kernel(ts, bb, IN, Hp, T, needs_mask, unroll_k),
        out_shape=out_shapes,
        grid_spec=grid_spec,
        compiler_params=pltpu.CompilerParams(
            dimension_semantics=("parallel", "arbitrary"),
            vmem_limit_bytes=vmem_limit),
    )(x_in, w_in_t, w_rec_t)

    # Slice away padding; cast bf16 {0,1} spikes back to f32 for the API.
    outputs = spikes[:T, :B, :H].astype(jnp.float32)
    return outputs, (z_f[:B, :H], v_f[:B, :H], i_f[:B, :H])


def _reference_forward(x, input_weights, recurrent_weights, *, autapses=False):
    """Pure-JAX reference reproducing the torch loop with the same bf16
    matmul precision / f32 accumulation as the kernel, for validation."""
    T, B, IN = x.shape
    H = input_weights.shape[0]
    if not autapses:
        recurrent_weights = recurrent_weights * (
            1.0 - jnp.eye(H, dtype=recurrent_weights.dtype))
    w_in_t = jnp.transpose(input_weights).astype(jnp.bfloat16)
    w_rec_t = jnp.transpose(recurrent_weights).astype(jnp.bfloat16)

    z0 = jnp.zeros((B, H), jnp.float32)
    v0 = jnp.zeros((B, H), jnp.float32)
    i0 = jnp.zeros((B, H), jnp.float32)

    def step(state, x_t):
        z, v, i = state
        v_dec = ALPHA_V * v + BETA_V * i
        if GAMMA_V != 0.0:
            v_dec = v_dec + GAMMA_V
        i_dec = ALPHA_I * i
        spike = v_dec > V_TH
        z_new = spike.astype(jnp.float32)
        v_new = jnp.where(spike, V_RESET, v_dec)
        i_new = (i_dec
                 + jnp.dot(x_t.astype(jnp.bfloat16), w_in_t,
                           preferred_element_type=jnp.float32)
                 + jnp.dot(z.astype(jnp.bfloat16), w_rec_t,
                           preferred_element_type=jnp.float32))
        return (z_new, v_new, i_new), z_new

    (zf, vf, i_f), outs = lax.scan(step, (z0, v0, i0), x)
    return outs, (zf, vf, i_f)


if __name__ == "__main__":
    master_key = jax.random.PRNGKey(0)

    def run_case(T, B, IN, H, key, **kw):
        k_x, k_wi, k_wr = jax.random.split(key, 3)
        # Scale input so that some spikes actually fire.
        x = 4.0 * jax.random.uniform(k_x, (T, B, IN), dtype=jnp.float32)
        # Deterministic weight init matching torch: randn * sqrt(2/hidden).
        w_in = jax.random.normal(k_wi, (H, IN), jnp.float32) * jnp.sqrt(2.0 / H)
        w_rec = jax.random.normal(k_wr, (H, H), jnp.float32) * jnp.sqrt(2.0 / H)

        out, (z_f, v_f, i_f) = snn_recurrent_forward(x, w_in, w_rec, **kw)
        jax.block_until_ready((out, z_f, v_f, i_f))

        ref_out, (rz, rv, ri) = _reference_forward(x, w_in, w_rec)
        assert out.shape == (T, B, H)
        assert bool(jnp.allclose(out, ref_out, atol=1e-3)), "spike outputs mismatch"
        assert bool(jnp.allclose(z_f, rz, atol=1e-3)), "final z mismatch"
        assert bool(jnp.allclose(v_f, rv, atol=1e-3)), "final v mismatch"
        assert bool(jnp.allclose(i_f, ri, atol=1e-3)), "final i mismatch"

    k1, k2 = jax.random.split(master_key)
    # Case 1: evenly divisible time blocks, single batch block.
    run_case(32, 8, 16, 32, k1, time_block=8)
    # Case 2: ragged T (padded + masked last block) and a 2-block "parallel"
    # batch grid axis (per-batch-block resident state).
    run_case(30, 32, 16, 32, k2, time_block=8, batch_block=16)

    print("KERNEL_OK")
</pallas_src>

<mosaic_0001>
module attributes {stable_mosaic.version = 11 : i64} {
  func.func @kernel(%arg0: i32, %arg1: i32, %arg2: memref<8x8x16xf32, #tpu.memory_space<vmem>>, %arg3: memref<16x128xbf16, #tpu.memory_space<vmem>>, %arg4: memref<128x128xbf16, #tpu.memory_space<vmem>>, %arg5: memref<8x8x128xbf16, #tpu.memory_space<vmem>>, %arg6: memref<8x128xf32, #tpu.memory_space<vmem>>, %arg7: memref<8x128xf32, #tpu.memory_space<vmem>>, %arg8: memref<8x128xf32, #tpu.memory_space<vmem>>, %arg9: memref<64x128xf32, #tpu.memory_space<vmem>>) attributes {dimension_semantics = [#tpu.dimension_semantics<parallel>, #tpu.dimension_semantics<arbitrary>], iteration_bounds = array<i64: 1, 4>, scalar_prefetch = 0 : i64, scratch_operands = 1 : i64, tpu.core_type = #tpu.core_type<tc>, window_params = [{transform_indices = @transform_0, window_bounds = array<i64: 8, 8, 16>}, {pipeline_mode = #tpu.pipeline_mode<synchronous>, transform_indices = @transform_1, window_bounds = array<i64: 16, 128>}, {pipeline_mode = #tpu.pipeline_mode<synchronous>, transform_indices = @transform_2, window_bounds = array<i64: 128, 128>}, {transform_indices = @transform_3, window_bounds = array<i64: 8, 8, 128>}, {transform_indices = @transform_4, window_bounds = array<i64: 8, 128>}, {transform_indices = @transform_5, window_bounds = array<i64: 8, 128>}, {transform_indices = @transform_6, window_bounds = array<i64: 8, 128>}]} {
    %c0_i32 = arith.constant 0 : i32
    %0 = arith.cmpi eq, %arg1, %c0_i32 : i32
    %1 = arith.extui %0 : i1 to i32
    %c0_i32_0 = arith.constant 0 : i32
    %2 = arith.cmpi ne, %1, %c0_i32_0 : i32
    scf.if %2 {
      %cst_102 = arith.constant 0.000000e+00 : f32
      %218 = vector.broadcast %cst_102 : f32 to vector<8x128xf32>
      %c0_103 = arith.constant 0 : index
      %c0_104 = arith.constant 0 : index
      %219 = vector.load %arg6[%c0_103, %c0_104] : memref<8x128xf32, #tpu.memory_space<vmem>>, vector<8x128xf32>
      tpu.vector_store %arg6[%c0_103, %c0_104], %218 {strides = array<i32>} : memref<8x128xf32, #tpu.memory_space<vmem>>, vector<8x128xf32>,
      %cst_105 = arith.constant 0.000000e+00 : f32
      %220 = vector.broadcast %cst_105 : f32 to vector<8x128xf32>
      %c0_106 = arith.constant 0 : index
      %c0_107 = arith.constant 0 : index
      %221 = vector.load %arg7[%c0_106, %c0_107] : memref<8x128xf32, #tpu.memory_space<vmem>>, vector<8x128xf32>
      tpu.vector_store %arg7[%c0_106, %c0_107], %220 {strides = array<i32>} : memref<8x128xf32, #tpu.memory_space<vmem>>, vector<8x128xf32>,
      %cst_108 = arith.constant 0.000000e+00 : f32
      %222 = vector.broadcast %cst_108 : f32 to vector<8x128xf32>
      %c0_109 = arith.constant 0 : index
      %c0_110 = arith.constant 0 : index
      %223 = vector.load %arg8[%c0_109, %c0_110] : memref<8x128xf32, #tpu.memory_space<vmem>>, vector<8x128xf32>
      tpu.vector_store %arg8[%c0_109, %c0_110], %222 {strides = array<i32>} : memref<8x128xf32, #tpu.memory_space<vmem>>, vector<8x128xf32>,
    } else {
    }
    %c0 = arith.constant 0 : index
    %c0_1 = arith.constant 0 : index
    %c0_2 = arith.constant 0 : index
    %3 = vector.load %arg2[%c0, %c0_1, %c0_2] : memref<8x8x16xf32, #tpu.memory_space<vmem>>, vector<8x8x16xf32>
    %4 = vector.shape_cast %3 : vector<8x8x16xf32> to vector<64x16xf32>
    %5 = arith.truncf %4 : vector<64x16xf32> to vector<64x16xbf16>
    %c0_3 = arith.constant 0 : index
    %c0_4 = arith.constant 0 : index
    %6 = vector.load %arg3[%c0_3, %c0_4] : memref<16x128xbf16, #tpu.memory_space<vmem>>, vector<16x128xbf16>
    %cst = arith.constant dense<0.000000e+00> : vector<64x128xf32>
    %7 = tpu.matmul %5, %6, %cst {dimension_numbers = #tpu.dot_dimension_numbers<[1], [0], [0], [1], [0, 0, 1, 1], [], []>} : vector<64x16xbf16>, vector<16x128xbf16>, vector<64x128xf32> -> vector<64x128xf32>
    %c0_5 = arith.constant 0 : index
    %c0_6 = arith.constant 0 : index
    %8 = vector.load %arg9[%c0_5, %c0_6] : memref<64x128xf32, #tpu.memory_space<vmem>>, vector<64x128xf32>
    tpu.vector_store %arg9[%c0_5, %c0_6], %7 {strides = array<i32>} : memref<64x128xf32, #tpu.memory_space<vmem>>, vector<64x128xf32>,
    %c0_7 = arith.constant 0 : index
    %c0_8 = arith.constant 0 : index
    %9 = vector.load %arg4[%c0_7, %c0_8] : memref<128x128xbf16, #tpu.memory_space<vmem>>, vector<128x128xbf16>
    %c0_9 = arith.constant 0 : index
    %c0_10 = arith.constant 0 : index
    %10 = vector.load %arg6[%c0_9, %c0_10] : memref<8x128xf32, #tpu.memory_space<vmem>>, vector<8x128xf32>
    %11 = arith.truncf %10 : vector<8x128xf32> to vector<8x128xbf16>
    %c0_11 = arith.constant 0 : index
    %c0_12 = arith.constant 0 : index
    %12 = vector.load %arg7[%c0_11, %c0_12] : memref<8x128xf32, #tpu.memory_space<vmem>>, vector<8x128xf32>
    %c0_13 = arith.constant 0 : index
    %c0_14 = arith.constant 0 : index
    %13 = vector.load %arg8[%c0_13, %c0_14] : memref<8x128xf32, #tpu.memory_space<vmem>>, vector<8x128xf32>
    %c0_i32_15 = arith.constant 0 : i32
    %cst_16 = arith.constant 0.899999976 : f32
    %14 = vector.broadcast %cst_16 : f32 to vector<8x128xf32>
    %15 = arith.mulf %14, %12 : vector<8x128xf32>
    %cst_17 = arith.constant 1.000000e-01 : f32
    %16 = vector.broadcast %cst_17 : f32 to vector<8x128xf32>
    %17 = arith.mulf %16, %13 : vector<8x128xf32>
    %18 = arith.addf %15, %17 : vector<8x128xf32>
    %cst_18 = arith.constant 8.000000e-01 : f32
    %19 = vector.broadcast %cst_18 : f32 to vector<8x128xf32>
    %20 = arith.mulf %19, %13 : vector<8x128xf32>
    %cst_19 = arith.constant 1.000000e+00 : f32
    %21 = vector.broadcast %cst_19 : f32 to vector<8x128xf32>
    %22 = arith.cmpf ogt, %18, %21 : vector<8x128xf32>
    %23 = arith.extui %22 : vector<8x128xi1> to vector<8x128xi32>
    %24 = arith.sitofp %23 : vector<8x128xi32> to vector<8x128xf32>
    %25 = arith.truncf %24 : vector<8x128xf32> to vector<8x128xbf16>
    %cst_20 = arith.constant 0.000000e+00 : f32
    %26 = vector.broadcast %cst_20 : f32 to vector<8x128xf32>
    %27 = arith.select %22, %26, %18 : vector<8x128xi1>, vector<8x128xf32>
    %cst_21 = arith.constant dense<0.000000e+00> : vector<8x128xf32>
    %28 = tpu.matmul %11, %9, %cst_21 {dimension_numbers = #tpu.dot_dimension_numbers<[1], [0], [0], [1], [0, 0, 1, 1], [], []>} : vector<8x128xbf16>, vector<128x128xbf16>, vector<8x128xf32> -> vector<8x128xf32>
    %c8_i32 = arith.constant 8 : i32
    %29 = arith.muli %c0_i32_15, %c8_i32 : i32
    %30 = tpu.assume_multiple %29, 8 : i32
    %31 = arith.index_cast %30 : i32 to index
    %c0_22 = arith.constant 0 : index
    %32 = vector.load %arg9[%31, %c0_22] : memref<64x128xf32, #tpu.memory_space<vmem>>, vector<8x128xf32>
    %33 = arith.addf %20, %32 : vector<8x128xf32>
    %34 = arith.addf %33, %28 : vector<8x128xf32>
    %35 = arith.index_cast %c0_i32_15 : i32 to index
    %c0_23 = arith.constant 0 : index
    %c0_24 = arith.constant 0 : index
    %36 = vector.load %arg5[%35, %c0_23, %c0_24] : memref<8x8x128xbf16, #tpu.memory_space<vmem>>, vector<1x8x128xbf16>
    %37 = vector.shape_cast %36 : vector<1x8x128xbf16> to vector<8x128xbf16>
    %38 = vector.shape_cast %25 : vector<8x128xbf16> to vector<1x8x128xbf16>
    tpu.vector_store %arg5[%35, %c0_23, %c0_24], %38 {strides = array<i32>} : memref<8x8x128xbf16, #tpu.memory_space<vmem>>, vector<1x8x128xbf16>,
    %c1_i32 = arith.constant 1 : i32
    %cst_25 = arith.constant 0.899999976 : f32
    %39 = vector.broadcast %cst_25 : f32 to vector<8x128xf32>
    %40 = arith.mulf %39, %27 : vector<8x128xf32>
    %cst_26 = arith.constant 1.000000e-01 : f32
    %41 = vector.broadcast %cst_26 : f32 to vector<8x128xf32>
    %42 = arith.mulf %41, %34 : vector<8x128xf32>
    %43 = arith.addf %40, %42 : vector<8x128xf32>
    %cst_27 = arith.constant 8.000000e-01 : f32
    %44 = vector.broadcast %cst_27 : f32 to vector<8x128xf32>
    %45 = arith.mulf %44, %34 : vector<8x128xf32>
    %cst_28 = arith.constant 1.000000e+00 : f32
    %46 = vector.broadcast %cst_28 : f32 to vector<8x128xf32>
    %47 = arith.cmpf ogt, %43, %46 : vector<8x128xf32>
    %48 = arith.extui %47 : vector<8x128xi1> to vector<8x128xi32>
    %49 = arith.sitofp %48 : vector<8x128xi32> to vector<8x128xf32>
    %50 = arith.truncf %49 : vector<8x128xf32> to vector<8x128xbf16>
    %cst_29 = arith.constant 0.000000e+00 : f32
    %51 = vector.broadcast %cst_29 : f32 to vector<8x128xf32>
    %52 = arith.select %47, %51, %43 : vector<8x128xi1>, vector<8x128xf32>
    %cst_30 = arith.constant dense<0.000000e+00> : vector<8x128xf32>
    %53 = tpu.matmul %25, %9, %cst_30 {dimension_numbers = #tpu.dot_dimension_numbers<[1], [0], [0], [1], [0, 0, 1, 1], [], []>} : vector<8x128xbf16>, vector<128x128xbf16>, vector<8x128xf32> -> vector<8x128xf32>
    %c8_i32_31 = arith.constant 8 : i32
    %54 = arith.muli %c1_i32, %c8_i32_31 : i32
    %55 = tpu.assume_multiple %54, 8 : i32
    %56 = arith.index_cast %55 : i32 to index
    %c0_32 = arith.constant 0 : index
    %57 = vector.load %arg9[%56, %c0_32] : memref<64x128xf32, #tpu.memory_space<vmem>>, vector<8x128xf32>
    %58 = arith.addf %45, %57 : vector<8x128xf32>
    %59 = arith.addf %58, %53 : vector<8x128xf32>
    %60 = arith.index_cast %c1_i32 : i32 to index
    %c0_33 = arith.constant 0 : index
    %c0_34 = arith.constant 0 : index
    %61 = vector.load %arg5[%60, %c0_33, %c0_34] : memref<8x8x128xbf16, #tpu.memory_space<vmem>>, vector<1x8x128xbf16>
    %62 = vector.shape_cast %61 : vector<1x8x128xbf16> to vector<8x128xbf16>
    %63 = vector.shape_cast %50 : vector<8x128xbf16> to vector<1x8x128xbf16>
    tpu.vector_store %arg5[%60, %c0_33, %c0_34], %63 {strides = array<i32>} : memref<8x8x128xbf16, #tpu.memory_space<vmem>>, vector<1x8x128xbf16>,
    %c2_i32 = arith.constant 2 : i32
    %cst_35 = arith.constant 0.899999976 : f32
    %64 = vector.broadcast %cst_35 : f32 to vector<8x128xf32>
    %65 = arith.mulf %64, %52 : vector<8x128xf32>
    %cst_36 = arith.constant 1.000000e-01 : f32
    %66 = vector.broadcast %cst_36 : f32 to vector<8x128xf32>
    %67 = arith.mulf %66, %59 : vector<8x128xf32>
    %68 = arith.addf %65, %67 : vector<8x128xf32>
    %cst_37 = arith.constant 8.000000e-01 : f32
    %69 = vector.broadcast %cst_37 : f32 to vector<8x128xf32>
    %70 = arith.mulf %69, %59 : vector<8x128xf32>
    %cst_38 = arith.constant 1.000000e+00 : f32
    %71 = vector.broadcast %cst_38 : f32 to vector<8x128xf32>
    %72 = arith.cmpf ogt, %68, %71 : vector<8x128xf32>
    %73 = arith.extui %72 : vector<8x128xi1> to vector<8x128xi32>
    %74 = arith.sitofp %73 : vector<8x128xi32> to vector<8x128xf32>
    %75 = arith.truncf %74 : vector<8x128xf32> to vector<8x128xbf16>
    %cst_39 = arith.constant 0.000000e+00 : f32
    %76 = vector.broadcast %cst_39 : f32 to vector<8x128xf32>
    %77 = arith.select %72, %76, %68 : vector<8x128xi1>, vector<8x128xf32>
    %cst_40 = arith.constant dense<0.000000e+00> : vector<8x128xf32>
    %78 = tpu.matmul %50, %9, %cst_40 {dimension_numbers = #tpu.dot_dimension_numbers<[1], [0], [0], [1], [0, 0, 1, 1], [], []>} : vector<8x128xbf16>, vector<128x128xbf16>, vector<8x128xf32> -> vector<8x128xf32>
    %c8_i32_41 = arith.constant 8 : i32
    %79 = arith.muli %c2_i32, %c8_i32_41 : i32
    %80 = tpu.assume_multiple %79, 8 : i32
    %81 = arith.index_cast %80 : i32 to index
    %c0_42 = arith.constant 0 : index
    %82 = vector.load %arg9[%81, %c0_42] : memref<64x128xf32, #tpu.memory_space<vmem>>, vector<8x128xf32>
    %83 = arith.addf %70, %82 : vector<8x128xf32>
    %84 = arith.addf %83, %78 : vector<8x128xf32>
    %85 = arith.index_cast %c2_i32 : i32 to index
    %c0_43 = arith.constant 0 : index
    %c0_44 = arith.constant 0 : index
    %86 = vector.load %arg5[%85, %c0_43, %c0_44] : memref<8x8x128xbf16, #tpu.memory_space<vmem>>, vector<1x8x128xbf16>
    %87 = vector.shape_cast %86 : vector<1x8x128xbf16> to vector<8x128xbf16>
    %88 = vector.shape_cast %75 : vector<8x128xbf16> to vector<1x8x128xbf16>
    tpu.vector_store %arg5[%85, %c0_43, %c0_44], %88 {strides = array<i32>} : memref<8x8x128xbf16, #tpu.memory_space<vmem>>, vector<1x8x128xbf16>,
    %c3_i32 = arith.constant 3 : i32
    %cst_45 = arith.constant 0.899999976 : f32
    %89 = vector.broadcast %cst_45 : f32 to vector<8x128xf32>
    %90 = arith.mulf %89, %77 : vector<8x128xf32>
    %cst_46 = arith.constant 1.000000e-01 : f32
    %91 = vector.broadcast %cst_46 : f32 to vector<8x128xf32>
    %92 = arith.mulf %91, %84 : vector<8x128xf32>
    %93 = arith.addf %90, %92 : vector<8x128xf32>
    %cst_47 = arith.constant 8.000000e-01 : f32
    %94 = vector.broadcast %cst_47 : f32 to vector<8x128xf32>
    %95 = arith.mulf %94, %84 : vector<8x128xf32>
    %cst_48 = arith.constant 1.000000e+00 : f32
    %96 = vector.broadcast %cst_48 : f32 to vector<8x128xf32>
    %97 = arith.cmpf ogt, %93, %96 : vector<8x128xf32>
    %98 = arith.extui %97 : vector<8x128xi1> to vector<8x128xi32>
    %99 = arith.sitofp %98 : vector<8x128xi32> to vector<8x128xf32>
    %100 = arith.truncf %99 : vector<8x128xf32> to vector<8x128xbf16>
    %cst_49 = arith.constant 0.000000e+00 : f32
    %101 = vector.broadcast %cst_49 : f32 to vector<8x128xf32>
    %102 = arith.select %97, %101, %93 : vector<8x128xi1>, vector<8x128xf32>
    %cst_50 = arith.constant dense<0.000000e+00> : vector<8x128xf32>
    %103 = tpu.matmul %75, %9, %cst_50 {dimension_numbers = #tpu.dot_dimension_numbers<[1], [0], [0], [1], [0, 0, 1, 1], [], []>} : vector<8x128xbf16>, vector<128x128xbf16>, vector<8x128xf32> -> vector<8x128xf32>
    %c8_i32_51 = arith.constant 8 : i32
    %104 = arith.muli %c3_i32, %c8_i32_51 : i32
    %105 = tpu.assume_multiple %104, 8 : i32
    %106 = arith.index_cast %105 : i32 to index
    %c0_52 = arith.constant 0 : index
    %107 = vector.load %arg9[%106, %c0_52] : memref<64x128xf32, #tpu.memory_space<vmem>>, vector<8x128xf32>
    %108 = arith.addf %95, %107 : vector<8x128xf32>
    %109 = arith.addf %108, %103 : vector<8x128xf32>
    %110 = arith.index_cast %c3_i32 : i32 to index
    %c0_53 = arith.constant 0 : index
    %c0_54 = arith.constant 0 : index
    %111 = vector.load %arg5[%110, %c0_53, %c0_54] : memref<8x8x128xbf16, #tpu.memory_space<vmem>>, vector<1x8x128xbf16>
    %112 = vector.shape_cast %111 : vector<1x8x128xbf16> to vector<8x128xbf16>
    %113 = vector.shape_cast %100 : vector<8x128xbf16> to vector<1x8x128xbf16>
    tpu.vector_store %arg5[%110, %c0_53, %c0_54], %113 {strides = array<i32>} : memref<8x8x128xbf16, #tpu.memory_space<vmem>>, vector<1x8x128xbf16>,
    %c4_i32 = arith.constant 4 : i32
    %cst_55 = arith.constant 0.899999976 : f32
    %114 = vector.broadcast %cst_55 : f32 to vector<8x128xf32>
    %115 = arith.mulf %114, %102 : vector<8x128xf32>
    %cst_56 = arith.constant 1.000000e-01 : f32
    %116 = vector.broadcast %cst_56 : f32 to vector<8x128xf32>
    %117 = arith.mulf %116, %109 : vector<8x128xf32>
    %118 = arith.addf %115, %117 : vector<8x128xf32>
    %cst_57 = arith.constant 8.000000e-01 : f32
    %119 = vector.broadcast %cst_57 : f32 to vector<8x128xf32>
    %120 = arith.mulf %119, %109 : vector<8x128xf32>
    %cst_58 = arith.constant 1.000000e+00 : f32
    %121 = vector.broadcast %cst_58 : f32 to vector<8x128xf32>
    %122 = arith.cmpf ogt, %118, %121 : vector<8x128xf32>
    %123 = arith.extui %122 : vector<8x128xi1> to vector<8x128xi32>
    %124 = arith.sitofp %123 : vector<8x128xi32> to vector<8x128xf32>
    %125 = arith.truncf %124 : vector<8x128xf32> to vector<8x128xbf16>
    %cst_59 = arith.constant 0.000000e+00 : f32
    %126 = vector.broadcast %cst_59 : f32 to vector<8x128xf32>
    %127 = arith.select %122, %126, %118 : vector<8x128xi1>, vector<8x128xf32>
    %cst_60 = arith.constant dense<0.000000e+00> : vector<8x128xf32>
    %128 = tpu.matmul %100, %9, %cst_60 {dimension_numbers = #tpu.dot_dimension_numbers<[1], [0], [0], [1], [0, 0, 1, 1], [], []>} : vector<8x128xbf16>, vector<128x128xbf16>, vector<8x128xf32> -> vector<8x128xf32>
    %c8_i32_61 = arith.constant 8 : i32
    %129 = arith.muli %c4_i32, %c8_i32_61 : i32
    %130 = tpu.assume_multiple %129, 8 : i32
    %131 = arith.index_cast %130 : i32 to index
    %c0_62 = arith.constant 0 : index
    %132 = vector.load %arg9[%131, %c0_62] : memref<64x128xf32, #tpu.memory_space<vmem>>, vector<8x128xf32>
    %133 = arith.addf %120, %132 : vector<8x128xf32>
    %134 = arith.addf %133, %128 : vector<8x128xf32>
    %135 = arith.index_cast %c4_i32 : i32 to index
    %c0_63 = arith.constant 0 : index
    %c0_64 = arith.constant 0 : index
    %136 = vector.load %arg5[%135, %c0_63, %c0_64] : memref<8x8x128xbf16, #tpu.memory_space<vmem>>, vector<1x8x128xbf16>
    %137 = vector.shape_cast %136 : vector<1x8x128xbf16> to vector<8x128xbf16>
    %138 = vector.shape_cast %125 : vector<8x128xbf16> to vector<1x8x128xbf16>
    tpu.vector_store %arg5[%135, %c0_63, %c0_64], %138 {strides = array<i32>} : memref<8x8x128xbf16, #tpu.memory_space<vmem>>, vector<1x8x128xbf16>,
    %c5_i32 = arith.constant 5 : i32
    %cst_65 = arith.constant 0.899999976 : f32
    %139 = vector.broadcast %cst_65 : f32 to vector<8x128xf32>
    %140 = arith.mulf %139, %127 : vector<8x128xf32>
    %cst_66 = arith.constant 1.000000e-01 : f32
    %141 = vector.broadcast %cst_66 : f32 to vector<8x128xf32>
    %142 = arith.mulf %141, %134 : vector<8x128xf32>
    %143 = arith.addf %140, %142 : vector<8x128xf32>
    %cst_67 = arith.constant 8.000000e-01 : f32
    %144 = vector.broadcast %cst_67 : f32 to vector<8x128xf32>
    %145 = arith.mulf %144, %134 : vector<8x128xf32>
    %cst_68 = arith.constant 1.000000e+00 : f32
    %146 = vector.broadcast %cst_68 : f32 to vector<8x128xf32>
    %147 = arith.cmpf ogt, %143, %146 : vector<8x128xf32>
    %148 = arith.extui %147 : vector<8x128xi1> to vector<8x128xi32>
    %149 = arith.sitofp %148 : vector<8x128xi32> to vector<8x128xf32>
    %150 = arith.truncf %149 : vector<8x128xf32> to vector<8x128xbf16>
    %cst_69 = arith.constant 0.000000e+00 : f32
    %151 = vector.broadcast %cst_69 : f32 to vector<8x128xf32>
    %152 = arith.select %147, %151, %143 : vector<8x128xi1>, vector<8x128xf32>
    %cst_70 = arith.constant dense<0.000000e+00> : vector<8x128xf32>
    %153 = tpu.matmul %125, %9, %cst_70 {dimension_numbers = #tpu.dot_dimension_numbers<[1], [0], [0], [1], [0, 0, 1, 1], [], []>} : vector<8x128xbf16>, vector<128x128xbf16>, vector<8x128xf32> -> vector<8x128xf32>
    %c8_i32_71 = arith.constant 8 : i32
    %154 = arith.muli %c5_i32, %c8_i32_71 : i32
    %155 = tpu.assume_multiple %154, 8 : i32
    %156 = arith.index_cast %155 : i32 to index
    %c0_72 = arith.constant 0 : index
    %157 = vector.load %arg9[%156, %c0_72] : memref<64x128xf32, #tpu.memory_space<vmem>>, vector<8x128xf32>
    %158 = arith.addf %145, %157 : vector<8x128xf32>
    %159 = arith.addf %158, %153 : vector<8x128xf32>
    %160 = arith.index_cast %c5_i32 : i32 to index
    %c0_73 = arith.constant 0 : index
    %c0_74 = arith.constant 0 : index
    %161 = vector.load %arg5[%160, %c0_73, %c0_74] : memref<8x8x128xbf16, #tpu.memory_space<vmem>>, vector<1x8x128xbf16>
    %162 = vector.shape_cast %161 : vector<1x8x128xbf16> to vector<8x128xbf16>
    %163 = vector.shape_cast %150 : vector<8x128xbf16> to vector<1x8x128xbf16>
    tpu.vector_store %arg5[%160, %c0_73, %c0_74], %163 {strides = array<i32>} : memref<8x8x128xbf16, #tpu.memory_space<vmem>>, vector<1x8x128xbf16>,
    %c6_i32 = arith.constant 6 : i32
    %cst_75 = arith.constant 0.899999976 : f32
    %164 = vector.broadcast %cst_75 : f32 to vector<8x128xf32>
    %165 = arith.mulf %164, %152 : vector<8x128xf32>
    %cst_76 = arith.constant 1.000000e-01 : f32
    %166 = vector.broadcast %cst_76 : f32 to vector<8x128xf32>
    %167 = arith.mulf %166, %159 : vector<8x128xf32>
    %168 = arith.addf %165, %167 : vector<8x128xf32>
    %cst_77 = arith.constant 8.000000e-01 : f32
    %169 = vector.broadcast %cst_77 : f32 to vector<8x128xf32>
    %170 = arith.mulf %169, %159 : vector<8x128xf32>
    %cst_78 = arith.constant 1.000000e+00 : f32
    %171 = vector.broadcast %cst_78 : f32 to vector<8x128xf32>
    %172 = arith.cmpf ogt, %168, %171 : vector<8x128xf32>
    %173 = arith.extui %172 : vector<8x128xi1> to vector<8x128xi32>
    %174 = arith.sitofp %173 : vector<8x128xi32> to vector<8x128xf32>
    %175 = arith.truncf %174 : vector<8x128xf32> to vector<8x128xbf16>
    %cst_79 = arith.constant 0.000000e+00 : f32
    %176 = vector.broadcast %cst_79 : f32 to vector<8x128xf32>
    %177 = arith.select %172, %176, %168 : vector<8x128xi1>, vector<8x128xf32>
    %cst_80 = arith.constant dense<0.000000e+00> : vector<8x128xf32>
    %178 = tpu.matmul %150, %9, %cst_80 {dimension_numbers = #tpu.dot_dimension_numbers<[1], [0], [0], [1], [0, 0, 1, 1], [], []>} : vector<8x128xbf16>, vector<128x128xbf16>, vector<8x128xf32> -> vector<8x128xf32>
    %c8_i32_81 = arith.constant 8 : i32
    %179 = arith.muli %c6_i32, %c8_i32_81 : i32
    %180 = tpu.assume_multiple %179, 8 : i32
    %181 = arith.index_cast %180 : i32 to index
    %c0_82 = arith.constant 0 : index
    %182 = vector.load %arg9[%181, %c0_82] : memref<64x128xf32, #tpu.memory_space<vmem>>, vector<8x128xf32>
    %183 = arith.addf %170, %182 : vector<8x128xf32>
    %184 = arith.addf %183, %178 : vector<8x128xf32>
    %185 = arith.index_cast %c6_i32 : i32 to index
    %c0_83 = arith.constant 0 : index
    %c0_84 = arith.constant 0 : index
    %186 = vector.load %arg5[%185, %c0_83, %c0_84] : memref<8x8x128xbf16, #tpu.memory_space<vmem>>, vector<1x8x128xbf16>
    %187 = vector.shape_cast %186 : vector<1x8x128xbf16> to vector<8x128xbf16>
    %188 = vector.shape_cast %175 : vector<8x128xbf16> to vector<1x8x128xbf16>
    tpu.vector_store %arg5[%185, %c0_83, %c0_84], %188 {strides = array<i32>} : memref<8x8x128xbf16, #tpu.memory_space<vmem>>, vector<1x8x128xbf16>,
    %c7_i32 = arith.constant 7 : i32
    %cst_85 = arith.constant 0.899999976 : f32
    %189 = vector.broadcast %cst_85 : f32 to vector<8x128xf32>
    %190 = arith.mulf %189, %177 : vector<8x128xf32>
    %cst_86 = arith.constant 1.000000e-01 : f32
    %191 = vector.broadcast %cst_86 : f32 to vector<8x128xf32>
    %192 = arith.mulf %191, %184 : vector<8x128xf32>
    %193 = arith.addf %190, %192 : vector<8x128xf32>
    %cst_87 = arith.constant 8.000000e-01 : f32
    %194 = vector.broadcast %cst_87 : f32 to vector<8x128xf32>
    %195 = arith.mulf %194, %184 : vector<8x128xf32>
    %cst_88 = arith.constant 1.000000e+00 : f32
    %196 = vector.broadcast %cst_88 : f32 to vector<8x128xf32>
    %197 = arith.cmpf ogt, %193, %196 : vector<8x128xf32>
    %198 = arith.extui %197 : vector<8x128xi1> to vector<8x128xi32>
    %199 = arith.sitofp %198 : vector<8x128xi32> to vector<8x128xf32>
    %200 = arith.truncf %199 : vector<8x128xf32> to vector<8x128xbf16>
    %cst_89 = arith.constant 0.000000e+00 : f32
    %201 = vector.broadcast %cst_89 : f32 to vector<8x128xf32>
    %202 = arith.select %197, %201, %193 : vector<8x128xi1>, vector<8x128xf32>
    %cst_90 = arith.constant dense<0.000000e+00> : vector<8x128xf32>
    %203 = tpu.matmul %175, %9, %cst_90 {dimension_numbers = #tpu.dot_dimension_numbers<[1], [0], [0], [1], [0, 0, 1, 1], [], []>} : vector<8x128xbf16>, vector<128x128xbf16>, vector<8x128xf32> -> vector<8x128xf32>
    %c8_i32_91 = arith.constant 8 : i32
    %204 = arith.muli %c7_i32, %c8_i32_91 : i32
    %205 = tpu.assume_multiple %204, 8 : i32
    %206 = arith.index_cast %205 : i32 to index
    %c0_92 = arith.constant 0 : index
    %207 = vector.load %arg9[%206, %c0_92] : memref<64x128xf32, #tpu.memory_space<vmem>>, vector<8x128xf32>
    %208 = arith.addf %195, %207 : vector<8x128xf32>
    %209 = arith.addf %208, %203 : vector<8x128xf32>
    %210 = arith.index_cast %c7_i32 : i32 to index
    %c0_93 = arith.constant 0 : index
    %c0_94 = arith.constant 0 : index
    %211 = vector.load %arg5[%210, %c0_93, %c0_94] : memref<8x8x128xbf16, #tpu.memory_space<vmem>>, vector<1x8x128xbf16>
    %212 = vector.shape_cast %211 : vector<1x8x128xbf16> to vector<8x128xbf16>
    %213 = vector.shape_cast %200 : vector<8x128xbf16> to vector<1x8x128xbf16>
    tpu.vector_store %arg5[%210, %c0_93, %c0_94], %213 {strides = array<i32>} : memref<8x8x128xbf16, #tpu.memory_space<vmem>>, vector<1x8x128xbf16>,
    %c8_i32_95 = arith.constant 8 : i32
    %214 = arith.extf %200 : vector<8x128xbf16> to vector<8x128xf32>
    %c0_96 = arith.constant 0 : index
    %c0_97 = arith.constant 0 : index
    %215 = vector.load %arg6[%c0_96, %c0_97] : memref<8x128xf32, #tpu.memory_space<vmem>>, vector<8x128xf32>
    tpu.vector_store %arg6[%c0_96, %c0_97], %214 {strides = array<i32>} : memref<8x128xf32, #tpu.memory_space<vmem>>, vector<8x128xf32>,
    %c0_98 = arith.constant 0 : index
    %c0_99 = arith.constant 0 : index
    %216 = vector.load %arg7[%c0_98, %c0_99] : memref<8x128xf32, #tpu.memory_space<vmem>>, vector<8x128xf32>
    tpu.vector_store %arg7[%c0_98, %c0_99], %202 {strides = array<i32>} : memref<8x128xf32, #tpu.memory_space<vmem>>, vector<8x128xf32>,
    %c0_100 = arith.constant 0 : index
    %c0_101 = arith.constant 0 : index
    %217 = vector.load %arg8[%c0_100, %c0_101] : memref<8x128xf32, #tpu.memory_space<vmem>>, vector<8x128xf32>
    tpu.vector_store %arg8[%c0_100, %c0_101], %209 {strides = array<i32>} : memref<8x128xf32, #tpu.memory_space<vmem>>, vector<8x128xf32>,
    return
  }
  func.func @transform_0(%arg0: i32, %arg1: i32) -> (i32, i32, i32) {
    %c0_i32 = arith.constant 0 : i32
    %c0_i32_0 = arith.constant 0 : i32
    return %arg1, %arg0, %c0_i32 : i32, i32, i32
  }
  func.func @transform_1(%arg0: i32, %arg1: i32) -> (i32, i32) {
    %c0_i32 = arith.constant 0 : i32
    %c0_i32_0 = arith.constant 0 : i32
    %c0_i32_1 = arith.constant 0 : i32
    return %c0_i32, %c0_i32_0 : i32, i32
  }
  func.func @transform_2(%arg0: i32, %arg1: i32) -> (i32, i32) {
    %c0_i32 = arith.constant 0 : i32
    %c0_i32_0 = arith.constant 0 : i32
    %c0_i32_1 = arith.constant 0 : i32
    return %c0_i32, %c0_i32_0 : i32, i32
  }
  func.func @transform_3(%arg0: i32, %arg1: i32) -> (i32, i32, i32) {
    %c0_i32 = arith.constant 0 : i32
    %c0_i32_0 = arith.constant 0 : i32
    return %arg1, %arg0, %c0_i32 : i32, i32, i32
  }
  func.func @transform_4(%arg0: i32, %arg1: i32) -> (i32, i32) {
    %c0_i32 = arith.constant 0 : i32
    %c0_i32_0 = arith.constant 0 : i32
    return %arg0, %c0_i32 : i32, i32
  }
  func.func @transform_5(%arg0: i32, %arg1: i32) -> (i32, i32) {
    %c0_i32 = arith.constant 0 : i32
    %c0_i32_0 = arith.constant 0 : i32
    return %arg0, %c0_i32 : i32, i32
  }
  func.func @transform_6(%arg0: i32, %arg1: i32) -> (i32, i32) {
    %c0_i32 = arith.constant 0 : i32
    %c0_i32_0 = arith.constant 0 : i32
    return %arg0, %c0_i32 : i32, i32
  }
}

</mosaic_0001>

<llo_original>
// kernel: tpu_custom_call.1
$region0: #{tpu_custom_call.1}
  #allocation0 [shape = 'u32[]', space=smem, size = 0x4, offset = 0x4, fixed_abs, tag = 'smem constant byte address 0x4 - core index']
  #allocation1 [shape = 'u32[144,128]{1,0:T(1,128)}', space=vmem, size = 0x12000, scoped, tag = 'internal scratch']
  #allocation2 [shape = 'f32[64,128]{1,0:T(8,128)}', space=vmem, size = 0x8000, scoped, tag = 'scratch operand']
  %s0 = inlined_call_operand.vmem [shape: f32[32,8,16], index: 0, kind: input, shape index: {}]
  %s1 = inlined_call_operand.vmem [shape: bf16[16,128], index: 1, kind: input, shape index: {}]
  %s2 = inlined_call_operand.vmem [shape: bf16[128,128], index: 2, kind: input, shape index: {}]
  %s3 = inlined_call_operand.hbm [shape: bf16[32,8,128], index: 3, kind: output, shape index: {0}]
  %s4 = inlined_call_operand.hbm [shape: f32[8,128], index: 4, kind: output, shape index: {1}]
  %s5 = inlined_call_operand.hbm [shape: f32[8,128], index: 5, kind: output, shape index: {2}]
  %s6 = inlined_call_operand.hbm [shape: f32[8,128], index: 6, kind: output, shape index: {3}]
  %7 = xla_tuple %s3, %s4, %s5, %s6
  %s8 = sld [smem:[#allocation0]]
  $region73: #{tpu_custom_call.1} parent=0
    _
  %s10 = ssub.s32 1, %s8
  %s11 = scalar_select 0, %s10, %s8
  $region1: #{tpu_custom_call.1} parent=0
    #allocation3 [shape = 'u8[32768]{0}', space=vmem, size = 0x8000, scoped, tag = 'output window, operand 0']
    #allocation4 [shape = 's32[2]{0}', space=sflag, size = 0x8, scoped, tag = 'scoped memory for tpu_custom_call.1']
    #allocation5 [shape = 'u8[4096]{0}', space=vmem, size = 0x1000, scoped, tag = 'output window, operand 1, single buffered']
    #allocation6 [shape = 's32[1]{0}', space=sflag, size = 0x4, scoped, tag = 'scoped memory for tpu_custom_call.1']
    #allocation7 [shape = 'u8[4096]{0}', space=vmem, size = 0x1000, scoped, tag = 'output window, operand 2, single buffered']
    #allocation8 [shape = 'u8[4096]{0}', space=vmem, size = 0x1000, scoped, tag = 'output window, operand 3, single buffered']
    #allocation9 [shape = 's32[1]{0}', space=sflag, size = 0x4, scoped, tag = 'scoped memory for tpu_custom_call.1']
    %12 = vsyncpa [#allocation4], 0
    %s13 = scalar_lea.sflag [#allocation4], 1
    %14 = vsyncpa %s13, 0
    %15 = vsyncpa [#allocation6], 0
    %16 = vsyncpa [#allocation9], 0
    loop: start=0, step=1, limit=6
    $region2: #{tpu_custom_call.1} parent=1 // loop_pre_header
      _
    $region3: #{tpu_custom_call.1} parent=1 // loop_header
      %s18 = sphi 0, %s22
      %p19 = scmp.ge.s32.totalorder %s18, 6
      %s25 = sphi 0, %s37
      %s26 = sphi 0, %s33
      %s27 = sphi 0, %s25
      %s28 = sphi 0, %s26
      %s29 = sphi 0, %s27
      %s30 = sphi 0, %s28
      %s42 = sphi 0, %s44
      %s45 = sphi 0, %s42
      %s46 = sphi 0, %s45
      %s62 = sphi 0, %s46
      %s66 = sphi 0, %s66
      %s68 = sphi 0, %s66
      %s69 = sphi 0, %s68
      %s83 = sphi 0, %s69
      %s87 = sphi 0, %s87
      %s89 = sphi 0, %s87
      %s90 = sphi 0, %s89
      %s104 = sphi 0, %s90
      %s112 = sphi 0, %s114
      %s115 = sphi 0, %s112
      %s116 = sphi 0, %s115
      %s132 = sphi 0, %s116
      %s138 = sphi 0, %s140
      %s141 = sphi 0, %s138
      %s142 = sphi 0, %s141
      %s158 = sphi 0, %s142
      %s164 = sphi 0, %s166
      %s167 = sphi 0, %s164
      %s168 = sphi 0, %s167
      %s184 = sphi 0, %s168
      %s190 = sphi 0, %s192
      %s193 = sphi 0, %s190
      %s194 = sphi 0, %s193
      %s210 = sphi 0, %s194
    $region4: #{tpu_custom_call.1} parent=1 // loop_header_branch
      %21 = sbr.rel (%p19) target = $region8
    $region5: #{tpu_custom_call.1} parent=1 // loop_body
      %s23 = ssub.s32 %s18, 1
      %s24 = ssub.s32 %s18, 2
      %s31 = sadd.s32 1, %s26
      %p32 = scmp.ge.s32.totalorder %s31, 4
      %s33 = scalar_select %p32, 0, %s31
      %s34 = sadd.s32 1, %s25
      %s35 = scalar_select %p32, %s34, %s25
      %p36 = scmp.ge.s32.totalorder %s35, 1
      %s37 = scalar_select %p36, 0, %s35
      %s38 = ssub.s32 %s26, %s33
      %s39 = ssub.s32 %s25, %s37
      %s40 = sor.u32 %s38, %s39
      %p41 = scmp.eq.s32.totalorder %s40, 0
      %s43 = sadd.s32 %s42, 1
      %s44 = scalar_select %p41, %s42, %s43
      %p47 = pneg %p41
      %p48 = scmp.eq.s32.totalorder %s18, 3
      %p49 = por %p47, %p48
      %p50 = scmp.ne.s32.totalorder %s42, %s45
      %p51 = scmp.eq.s32.totalorder %s18, 0
      %p52 = por %p50, %p51
      %p53 = scmp.ne.s32.totalorder %s42, %s45
      %p54 = scmp.eq.s32.totalorder %s23, 3
      %p55 = por %p53, %p54
      %p56 = scmp.ne.s32.totalorder %s45, %s46
      %p57 = scmp.eq.s32.totalorder %s23, 0
      %p58 = por %p56, %p57
      %p59 = scmp.ne.s32.totalorder %s45, %s46
      %p60 = scmp.eq.s32.totalorder %s24, 3
      %p61 = por %p59, %p60
      %p63 = scmp.ne.s32.totalorder %s46, %s62
      %p64 = scmp.eq.s32.totalorder %s24, 0
      %p65 = por %p63, %p64
      %s67 = sadd.s32 %s66, 1
      %p70 = scmp.eq.s32.totalorder %s18, 3
      %p71 = scmp.ne.s32.totalorder %s66, %s68
      %p72 = scmp.eq.s32.totalorder %s18, 0
      %p73 = por %p71, %p72
      %p74 = scmp.ne.s32.totalorder %s66, %s68
      %p75 = scmp.eq.s32.totalorder %s23, 3
      %p76 = por %p74, %p75
      %p77 = scmp.ne.s32.totalorder %s68, %s69
      %p78 = scmp.eq.s32.totalorder %s23, 0
      %p79 = por %p77, %p78
      %p80 = scmp.ne.s32.totalorder %s68, %s69
      %p81 = scmp.eq.s32.totalorder %s24, 3
      %p82 = por %p80, %p81
      %p84 = scmp.ne.s32.totalorder %s69, %s83
      %p85 = scmp.eq.s32.totalorder %s24, 0
      %p86 = por %p84, %p85
      %s88 = sadd.s32 %s87, 1
      %p91 = scmp.eq.s32.totalorder %s18, 3
      %p92 = scmp.ne.s32.totalorder %s87, %s89
      %p93 = scmp.eq.s32.totalorder %s18, 0
      %p94 = por %p92, %p93
      %p95 = scmp.ne.s32.totalorder %s87, %s89
      %p96 = scmp.eq.s32.totalorder %s23, 3
      %p97 = por %p95, %p96
      %p98 = scmp.ne.s32.totalorder %s89, %s90
      %p99 = scmp.eq.s32.totalorder %s23, 0
      %p100 = por %p98, %p99
      %p101 = scmp.ne.s32.totalorder %s89, %s90
      %p102 = scmp.eq.s32.totalorder %s24, 3
      %p103 = por %p101, %p102
      %p105 = scmp.ne.s32.totalorder %s90, %s104
      %p106 = scmp.eq.s32.totalorder %s24, 0
      %p107 = por %p105, %p106
      %s108 = ssub.s32 %s26, %s33
      %s109 = ssub.s32 %s25, %s37
      %s110 = sor.u32 %s108, %s109
      %p111 = scmp.eq.s32.totalorder %s110, 0
      %s113 = sadd.s32 %s112, 1
      %s114 = scalar_select %p111, %s112, %s113
      %p117 = pneg %p111
      %p118 = scmp.eq.s32.totalorder %s18, 3
      %p119 = por %p117, %p118
      %p120 = scmp.ne.s32.totalorder %s112, %s115
      %p121 = scmp.eq.s32.totalorder %s18, 0
      %p122 = por %p120, %p121
      %p123 = scmp.ne.s32.totalorder %s112, %s115
      %p124 = scmp.eq.s32.totalorder %s23, 3
      %p125 = por %p123, %p124
      %p126 = scmp.ne.s32.totalorder %s115, %s116
      %p127 = scmp.eq.s32.totalorder %s23, 0
      %p128 = por %p126, %p127
      %p129 = scmp.ne.s32.totalorder %s115, %s116
      %p130 = scmp.eq.s32.totalorder %s24, 3
      %p131 = por %p129, %p130
      %p133 = scmp.ne.s32.totalorder %s116, %s132
      %p134 = scmp.eq.s32.totalorder %s24, 0
      %p135 = por %p133, %p134
      %s136 = ssub.s32 %s25, %s37
      %p137 = scmp.eq.s32.totalorder %s136, 0
      %s139 = sadd.s32 %s138, 1
      %s140 = scalar_select %p137, %s138, %s139
      %p143 = pneg %p137
      %p144 = scmp.eq.s32.totalorder %s18, 3
      %p145 = por %p143, %p144
      %p146 = scmp.ne.s32.totalorder %s138, %s141
      %p147 = scmp.eq.s32.totalorder %s18, 0
      %p148 = por %p146, %p147
      %p149 = scmp.ne.s32.totalorder %s138, %s141
      %p150 = scmp.eq.s32.totalorder %s23, 3
      %p151 = por %p149, %p150
      %p152 = scmp.ne.s32.totalorder %s141, %s142
      %p153 = scmp.eq.s32.totalorder %s23, 0
      %p154 = por %p152, %p153
      %p155 = scmp.ne.s32.totalorder %s141, %s142
      %p156 = scmp.eq.s32.totalorder %s24, 3
      %p157 = por %p155, %p156
      %p159 = scmp.ne.s32.totalorder %s142, %s158
      %p160 = scmp.eq.s32.totalorder %s24, 0
      %p161 = por %p159, %p160
      %s162 = ssub.s32 %s25, %s37
      %p163 = scmp.eq.s32.totalorder %s162, 0
      %s165 = sadd.s32 %s164, 1
      %s166 = scalar_select %p163, %s164, %s165
      %p169 = pneg %p163
      %p170 = scmp.eq.s32.totalorder %s18, 3
      %p171 = por %p169, %p170
      %p172 = scmp.ne.s32.totalorder %s164, %s167
      %p173 = scmp.eq.s32.totalorder %s18, 0
      %p174 = por %p172, %p173
      %p175 = scmp.ne.s32.totalorder %s164, %s167
      %p176 = scmp.eq.s32.totalorder %s23, 3
      %p177 = por %p175, %p176
      %p178 = scmp.ne.s32.totalorder %s167, %s168
      %p179 = scmp.eq.s32.totalorder %s23, 0
      %p180 = por %p178, %p179
      %p181 = scmp.ne.s32.totalorder %s167, %s168
      %p182 = scmp.eq.s32.totalorder %s24, 3
      %p183 = por %p181, %p182
      %p185 = scmp.ne.s32.totalorder %s168, %s184
      %p186 = scmp.eq.s32.totalorder %s24, 0
      %p187 = por %p185, %p186
      %s188 = ssub.s32 %s25, %s37
      %p189 = scmp.eq.s32.totalorder %s188, 0
      %s191 = sadd.s32 %s190, 1
      %s192 = scalar_select %p189, %s190, %s191
      %p195 = pneg %p189
      %p196 = scmp.eq.s32.totalorder %s18, 3
      %p197 = por %p195, %p196
      %p198 = scmp.ne.s32.totalorder %s190, %s193
      %p199 = scmp.eq.s32.totalorder %s18, 0
      %p200 = por %p198, %p199
      %p201 = scmp.ne.s32.totalorder %s190, %s193
      %p202 = scmp.eq.s32.totalorder %s23, 3
      %p203 = por %p201, %p202
      %p204 = scmp.ne.s32.totalorder %s193, %s194
      %p205 = scmp.eq.s32.totalorder %s23, 0
      %p206 = por %p204, %p205
      %p207 = scmp.ne.s32.totalorder %s193, %s194
      %p208 = scmp.eq.s32.totalorder %s24, 3
      %p209 = por %p207, %p208
      %p211 = scmp.ne.s32.totalorder %s194, %s210
      %p212 = scmp.eq.s32.totalorder %s24, 0
      %p213 = por %p211, %p212
      %p214 = scmp.le.s32.totalorder 1, %s18
      %p215 = scmp.lt.s32.totalorder %s18, 5
      %p216 = pnand %p214, %p215
      %p217 = pneg %p216
      // Predicated region
      $region9: #{tpu_custom_call.1} parent=5 // pred_check
        _
      $region10: #{tpu_custom_call.1} parent=5 // pred_check_branch
        %219 = sbr.rel (%p216) target = $region12
      $region11: #{tpu_custom_call.1} parent=5 // pred_region
        %s220 = ssub.s32 %s18, 1
        // Predicated region
        $region13: #{tpu_custom_call.1} parent=11 // pred_check
          %p221 = pneg %p79
        $region14: #{tpu_custom_call.1} parent=11 // pred_check_branch
          %223 = sbr.rel (%p221) target = $region16
        $region15: #{tpu_custom_call.1} parent=11 // pred_region
          _
        $region16: #{tpu_custom_call.1} parent=11 // pred_fallthru
          _
        // Predicated region
        $region17: #{tpu_custom_call.1} parent=11 // pred_check
          %p224 = pneg %p100
        $region18: #{tpu_custom_call.1} parent=11 // pred_check_branch
          %226 = sbr.rel (%p224) target = $region20
        $region19: #{tpu_custom_call.1} parent=11 // pred_region
          _
        $region20: #{tpu_custom_call.1} parent=11 // pred_fallthru
          _
      $region12: #{tpu_custom_call.1} parent=5 // pred_fallthru
        _
      %p227 = scmp.lt.s32.totalorder %s18, 4
      // Predicated region
      $region21: #{tpu_custom_call.1} parent=5 // pred_check
        %p228 = pneg %p227
      $region22: #{tpu_custom_call.1} parent=5 // pred_check_branch
        %230 = sbr.rel (%p228) target = $region24
      $region23: #{tpu_custom_call.1} parent=5 // pred_region
        // Predicated region
        $region25: #{tpu_custom_call.1} parent=23 // pred_check
          %p231 = pneg %p52
        $region26: #{tpu_custom_call.1} parent=23 // pred_check_branch
          %233 = sbr.rel (%p231) target = $region28
        $region27: #{tpu_custom_call.1} parent=23 // pred_region
          %s234 = smul.u32 8, %s26
          %p235 = scmp.lt.s32.totalorder %s234, 31
          %s236 = scalar_select %p235, %s234, 31
          %p237 = scmp.lt.s32.totalorder %s25, 0
          %s238 = scalar_select %p237, %s25, 0
          %s239 = sadd.s32 %s238, %s236
          %s240 = smul.addr %s239, 8
          %s241 = scalar_lea.vmem %s0, %s240
          %s242 = smul.u32 8, %s26
        $region28: #{tpu_custom_call.1} parent=23 // pred_fallthru
          _
      $region24: #{tpu_custom_call.1} parent=5 // pred_fallthru
        _
      %p243 = scmp.le.s32.totalorder 1, %s18
      %p244 = scmp.lt.s32.totalorder %s18, 5
      %p245 = pnand %p243, %p244
      %p246 = pneg %p245
      // Predicated region
      $region29: #{tpu_custom_call.1} parent=5 // pred_check
        _
      $region30: #{tpu_custom_call.1} parent=5 // pred_check_branch
        %248 = sbr.rel (%p245) target = $region32
      $region31: #{tpu_custom_call.1} parent=5 // pred_region
        %s249 = ssub.s32 %s18, 1
        %s250 = smul.u32 8, %s28
        %p251 = scmp.lt.s32.totalorder %s250, 31
        %s252 = scalar_select %p251, %s250, 31
        %p253 = scmp.lt.s32.totalorder %s27, 0
        %s254 = scalar_select %p253, %s27, 0
        %s255 = sadd.s32 %s254, %s252
        %s256 = smul.addr %s255, 8
        %s257 = scalar_lea.vmem %s0, %s256
        %p258 = pneg %p58
        %p259 = pneg %p55
        %p260 = pneg %p79
        %p261 = pneg %p76
        %p262 = pneg %p100
        %p263 = pneg %p97
        %p264 = pneg %p128
        %p265 = pneg %p125
        %s266 = sand.u32 %s115, 1
        %s267 = scalar_lea.sflag [#allocation4], %s266
        %s268 = sand.u32 %s115, 1
        %s269 = smul.addr %s268, 32
        %s270 = scalar_lea.vmem [#allocation3], %s269
        %p271 = pneg %p154
        %p272 = pneg %p151
        %p273 = pneg %p180
        %p274 = pneg %p177
        %p275 = pneg %p206
        %p276 = pneg %p203
        %s277 = smul.u32 8, %s28
        %p278 = scmp.lt.s32.totalorder %s277, 31
        %s279 = scalar_select %p278, %s277, 31
        %p280 = scmp.lt.s32.totalorder %s27, 0
        %s281 = scalar_select %p280, %s27, 0
        %s282 = sadd.s32 %s281, %s279
        %s283 = smul.addr %s282, 8
        %s284 = scalar_lea.vmem %s0, %s283
        %s285 = smul.u32 8, %s28
        %s286 = smul.u32 8, %s28
        %p288 = scmp.eq.s32.totalorder %s28, 0
        // Predicated region
        $region33: #{tpu_custom_call.1} parent=31 // pred_check
          %p289 = pneg %p288
        $region34: #{tpu_custom_call.1} parent=31 // pred_check_branch
          %291 = sbr.rel (%p289) target = $region36
        $region35: #{tpu_custom_call.1} parent=31 // pred_region
          %292 = vst [vmem:[#allocation5] sm:$0xff] 0.0
          %293 = vst [vmem:[#allocation7] sm:$0xff] 0.0
          %294 = vst [vmem:[#allocation8] sm:$0xff] 0.0
        $region36: #{tpu_custom_call.1} parent=31 // pred_fallthru
          _
        %v295 = vld [vmem:[%s284] sm:$0xff]
        %v296 = vld [vmem:[%s284 + $0x8] sm:$0xff]
        %v297 = vld [vmem:[%s284 + $0x10] sm:$0xff]
        %v298 = vld [vmem:[%s284 + $0x18] sm:$0xff]
        %v299 = vld [vmem:[%s284 + $0x20] sm:$0xff]
        %v300 = vld [vmem:[%s284 + $0x28] sm:$0xff]
        %v301 = vld [vmem:[%s284 + $0x30] sm:$0xff]
        %v302 = vld [vmem:[%s284 + $0x38] sm:$0xff]
        %v303 = vpack.c.bf16 %v296, %v295
        %v304 = vpack.c.bf16 %v298, %v297
        %v305 = vpack.c.bf16 %v300, %v299
        %v306 = vpack.c.bf16 %v302, %v301
        %v307 = vld [vmem:[%s1] sm:$0xf]
        %v308 = vld [vmem:[%s1 + $0x4] sm:$0xf]
        %v311 = vunpack.c.l.b16 %v307
        %v312 = vunpack.c.l.b16 %v308
        %v313 = vpack.c.b16 %v312, %v311
        %vm315 = vcmask 130048
        %v317 = vsel %vm315, %v303, 0
        %v320 = vsel %vm315, %v304, 0
        %v323 = vsel %vm315, %v305, 0
        %v326 = vsel %vm315, %v306, 0
        %328 = vmatprep.subr.bf16.mxu0 0
        %329 = vmatpush1.bf16.msra.mxu0 0
        %330 = vmatprep.subr.bf16.mxu0 0
        %331 = vmatpush1.bf16.msra.mxu0 0
        %332 = vmatprep.subr.bf16.mxu0 0
        %333 = vmatpush1.bf16.msra.mxu0 0
        %334 = vmatprep.subr.bf16.mxu0 0
        %335 = vmatpush1.bf16.msra.mxu0 0
        %336 = vmatprep.subr.bf16.mxu0 0
        %337 = vmatpush1.bf16.msra.mxu0 0
        %338 = vmatprep.subr.bf16.mxu0 0
        %339 = vmatpush1.bf16.msra.mxu0 0
        %340 = vmatprep.subr.bf16.mxu0 0
        %341 = vmatpush1.bf16.msra.mxu0 0
        %342 = vmatprep.subr.bf16.mxu0 0
        %343 = vmatpush1.bf16.msra.mxu0 %v313
        %344 = vmatprep.subr.bf16.mxu0 0
        %345 = vmatpush2.bf16.msra.mxu0 0
        %346 = vmatprep.subr.bf16.mxu0 0
        %347 = vmatpush2.bf16.msra.mxu0 0
        %348 = vmatprep.subr.bf16.mxu0 0
        %349 = vmatpush2.bf16.msra.mxu0 0
        %350 = vmatprep.subr.bf16.mxu0 0
        %351 = vmatpush2.bf16.msra.mxu0 0
        %352 = vmatprep.subr.bf16.mxu0 0
        %353 = vmatpush2.bf16.msra.mxu0 0
        %354 = vmatprep.subr.bf16.mxu0 0
        %355 = vmatpush2.bf16.msra.mxu0 0
        %356 = vmatprep.subr.bf16.mxu0 0
        %357 = vmatpush2.bf16.msra.mxu0 0
        %358 = vmatprep.subr.bf16.mxu0 0
        %359 = vmatpush2.bf16.msra.mxu0 0
        %360 = vmatprep.mubr.bf16.mxu0 0
        %361 = vmatmul.mubr.bf16.gmra.mxu0 %v317
        %v362 = vpop.f32.mrf.mxu0
        %v363 = vadd.f32 0.0, %v362
        %v364 = vpop.f32.mrf.mxu0
        %v365 = vpop.f32.mrf.mxu0
        %v366 = vadd.f32 0.0, %v365
        %v367 = vpop.f32.mrf.mxu0
        %368 = vmatprep.mubr.bf16.mxu0 0
        %369 = vmatmul.mubr.bf16.gmra.mxu0 %v320
        %v370 = vpop.f32.mrf.mxu0
        %v371 = vadd.f32 0.0, %v370
        %v372 = vpop.f32.mrf.mxu0
        %v373 = vpop.f32.mrf.mxu0
        %v374 = vadd.f32 0.0, %v373
        %v375 = vpop.f32.mrf.mxu0
        %376 = vmatprep.mubr.bf16.mxu0 0
        %377 = vmatmul.mubr.bf16.gmra.mxu0 %v323
        %v378 = vpop.f32.mrf.mxu0
        %v379 = vadd.f32 0.0, %v378
        %v380 = vpop.f32.mrf.mxu0
        %v381 = vpop.f32.mrf.mxu0
        %v382 = vadd.f32 0.0, %v381
        %v383 = vpop.f32.mrf.mxu0
        %384 = vmatprep.mubr.bf16.mxu0 0
        %385 = vmatmul.mubr.bf16.gmra.mxu0 %v326
        %v386 = vpop.f32.mrf.mxu0
        %v387 = vadd.f32 0.0, %v386
        %v388 = vpop.f32.mrf.mxu0
        %v389 = vpop.f32.mrf.mxu0
        %v390 = vadd.f32 0.0, %v389
        %v391 = vpop.f32.mrf.mxu0
        %392 = vdwg.mxu0
        %393 = vst [vmem:[#allocation2] sm:$0xff] %v363
        %394 = vst [vmem:[#allocation2 + $0x8] sm:$0xff] %v366
        %395 = vst [vmem:[#allocation2 + $0x10] sm:$0xff] %v371
        %396 = vst [vmem:[#allocation2 + $0x18] sm:$0xff] %v374
        %397 = vst [vmem:[#allocation2 + $0x20] sm:$0xff] %v379
        %398 = vst [vmem:[#allocation2 + $0x28] sm:$0xff] %v382
        %399 = vst [vmem:[#allocation2 + $0x30] sm:$0xff] %v387
        %400 = vst [vmem:[#allocation2 + $0x38] sm:$0xff] %v390
        %v401 = vld [vmem:[%s2] sm:$0xf]
        %v402 = vld [vmem:[%s2 + $0x4] sm:$0xf]
        %v403 = vld [vmem:[%s2 + $0x8] sm:$0xf]
        %v404 = vld [vmem:[%s2 + $0xc] sm:$0xf]
        %v405 = vld [vmem:[%s2 + $0x10] sm:$0xf]
        %v406 = vld [vmem:[%s2 + $0x14] sm:$0xf]
        %v407 = vld [vmem:[%s2 + $0x18] sm:$0xf]
        %v408 = vld [vmem:[%s2 + $0x1c] sm:$0xf]
        %v409 = vld [vmem:[%s2 + $0x20] sm:$0xf]
        %v410 = vld [vmem:[%s2 + $0x24] sm:$0xf]
        %v411 = vld [vmem:[%s2 + $0x28] sm:$0xf]
        %v412 = vld [vmem:[%s2 + $0x2c] sm:$0xf]
        %v413 = vld [vmem:[%s2 + $0x30] sm:$0xf]
        %v414 = vld [vmem:[%s2 + $0x34] sm:$0xf]
        %v415 = vld [vmem:[%s2 + $0x38] sm:$0xf]
        %v416 = vld [vmem:[%s2 + $0x3c] sm:$0xf]
        %v417 = vld [vmem:[#allocation5] sm:$0xff]
        %v418 = vpack.c.bf16 %v417, %v417
        %v419 = vld [vmem:[#allocation7] sm:$0xff]
        %v420 = vld [vmem:[#allocation8] sm:$0xff]
        %v421 = vmul.f32 %v419, 0.9
        %v422 = vmul.f32 %v420, 0.1
        %v423 = vadd.f32 %v421, %v422
        %v424 = vmul.f32 %v420, 0.8
        %vm425 = vcmp.gt.f32.partialorder %v423, 1.0
        %v426 = vsel %vm425, 1, 0
        %v427 = vcvt.s32.f32 %v426
        %v428 = vpack.c.bf16 %v427, %v427
        %v429 = vsel %vm425, 0.0, %v423
        %v446 = vunpack.c.l.b16 %v401
        %v447 = vunpack.c.l.b16 %v402
        %v448 = vunpack.c.l.b16 %v403
        %v449 = vunpack.c.l.b16 %v404
        %v450 = vunpack.c.l.b16 %v405
        %v451 = vunpack.c.l.b16 %v406
        %v452 = vunpack.c.l.b16 %v407
        %v453 = vunpack.c.l.b16 %v408
        %v454 = vunpack.c.l.b16 %v409
        %v455 = vunpack.c.l.b16 %v410
        %v456 = vunpack.c.l.b16 %v411
        %v457 = vunpack.c.l.b16 %v412
        %v458 = vunpack.c.l.b16 %v413
        %v459 = vunpack.c.l.b16 %v414
        %v460 = vunpack.c.l.b16 %v415
        %v461 = vunpack.c.l.b16 %v416
        %v462 = vpack.c.b16 %v447, %v446
        %v463 = vpack.c.b16 %v449, %v448
        %v464 = vpack.c.b16 %v451, %v450
        %v465 = vpack.c.b16 %v453, %v452
        %v466 = vpack.c.b16 %v455, %v454
        %v467 = vpack.c.b16 %v457, %v456
        %v468 = vpack.c.b16 %v459, %v458
        %v469 = vpack.c.b16 %v461, %v460
        %478 = vmatprep.subr.bf16.mxu0 0
        %479 = vmatpush1.bf16.msra.mxu0 %v469
        %480 = vmatprep.subr.bf16.mxu0 0
        %481 = vmatpush1.bf16.msra.mxu0 %v468
        %482 = vmatprep.subr.bf16.mxu0 0
        %483 = vmatpush1.bf16.msra.mxu0 %v467
        %484 = vmatprep.subr.bf16.mxu0 0
        %485 = vmatpush1.bf16.msra.mxu0 %v466
        %486 = vmatprep.subr.bf16.mxu0 0
        %487 = vmatpush1.bf16.msra.mxu0 %v465
        %488 = vmatprep.subr.bf16.mxu0 0
        %489 = vmatpush1.bf16.msra.mxu0 %v464
        %490 = vmatprep.subr.bf16.mxu0 0
        %491 = vmatpush1.bf16.msra.mxu0 %v463
        %492 = vmatprep.subr.bf16.mxu0 0
        %493 = vmatpush1.bf16.msra.mxu0 %v462
        %494 = vmatprep.subr.bf16.mxu0 0
        %495 = vmatpush2.bf16.msra.mxu0 0
        %496 = vmatprep.subr.bf16.mxu0 0
        %497 = vmatpush2.bf16.msra.mxu0 0
        %498 = vmatprep.subr.bf16.mxu0 0
        %499 = vmatpush2.bf16.msra.mxu0 0
        %500 = vmatprep.subr.bf16.mxu0 0
        %501 = vmatpush2.bf16.msra.mxu0 0
        %502 = vmatprep.subr.bf16.mxu0 0
        %503 = vmatpush2.bf16.msra.mxu0 0
        %504 = vmatprep.subr.bf16.mxu0 0
        %505 = vmatpush2.bf16.msra.mxu0 0
        %506 = vmatprep.subr.bf16.mxu0 0
        %507 = vmatpush2.bf16.msra.mxu0 0
        %508 = vmatprep.subr.bf16.mxu0 0
        %509 = vmatpush2.bf16.msra.mxu0 0
        %510 = vmatprep.mubr.bf16.mxu0 0
        %511 = vmatmul.mubr.bf16.gmra.mxu0 %v418
        %v512 = vpop.f32.mrf.mxu0
        %v513 = vadd.f32 0.0, %v512
        %v514 = vpop.f32.mrf.mxu0
        %v515 = vpop.f32.mrf.mxu0
        %v516 = vpop.f32.mrf.mxu0
        %517 = vdwg.mxu0
        %v518 = vld [vmem:[#allocation2] sm:$0xff]
        %v519 = vadd.f32 %v424, %v518
        %v520 = vadd.f32 %v519, %v513
        %521 = vst [vmem:[%s270] sm:$0xf] %v428
        %v522 = vmul.f32 %v429, 0.9
        %v523 = vmul.f32 %v520, 0.1
        %v524 = vadd.f32 %v522, %v523
        %v525 = vmul.f32 %v520, 0.8
        %vm526 = vcmp.gt.f32.partialorder %v524, 1.0
        %v527 = vsel %vm526, 1, 0
        %v528 = vcvt.s32.f32 %v527
        %v529 = vpack.c.bf16 %v528, %v528
        %v530 = vsel %vm526, 0.0, %v524
        %531 = vmatprep.subr.bf16.mxu0 0
        %532 = vmatpush1.bf16.msra.mxu0 %v469
        %533 = vmatprep.subr.bf16.mxu0 0
        %534 = vmatpush1.bf16.msra.mxu0 %v468
        %535 = vmatprep.subr.bf16.mxu0 0
        %536 = vmatpush1.bf16.msra.mxu0 %v467
        %537 = vmatprep.subr.bf16.mxu0 0
        %538 = vmatpush1.bf16.msra.mxu0 %v466
        %539 = vmatprep.subr.bf16.mxu0 0
        %540 = vmatpush1.bf16.msra.mxu0 %v465
        %541 = vmatprep.subr.bf16.mxu0 0
        %542 = vmatpush1.bf16.msra.mxu0 %v464
        %543 = vmatprep.subr.bf16.mxu0 0
        %544 = vmatpush1.bf16.msra.mxu0 %v463
        %545 = vmatprep.subr.bf16.mxu0 0
        %546 = vmatpush1.bf16.msra.mxu0 %v462
        %547 = vmatprep.subr.bf16.mxu0 0
        %548 = vmatpush2.bf16.msra.mxu0 0
        %549 = vmatprep.subr.bf16.mxu0 0
        %550 = vmatpush2.bf16.msra.mxu0 0
        %551 = vmatprep.subr.bf16.mxu0 0
        %552 = vmatpush2.bf16.msra.mxu0 0
        %553 = vmatprep.subr.bf16.mxu0 0
        %554 = vmatpush2.bf16.msra.mxu0 0
        %555 = vmatprep.subr.bf16.mxu0 0
        %556 = vmatpush2.bf16.msra.mxu0 0
        %557 = vmatprep.subr.bf16.mxu0 0
        %558 = vmatpush2.bf16.msra.mxu0 0
        %559 = vmatprep.subr.bf16.mxu0 0
        %560 = vmatpush2.bf16.msra.mxu0 0
        %561 = vmatprep.subr.bf16.mxu0 0
        %562 = vmatpush2.bf16.msra.mxu0 0
        %563 = vmatprep.mubr.bf16.mxu0 0
        %564 = vmatmul.mubr.bf16.gmra.mxu0 %v428
        %v565 = vpop.f32.mrf.mxu0
        %v566 = vadd.f32 0.0, %v565
        %v567 = vpop.f32.mrf.mxu0
        %v568 = vpop.f32.mrf.mxu0
        %v569 = vpop.f32.mrf.mxu0
        %570 = vdwg.mxu0
        %s571 = scalar_lea.vmem [#allocation2], 8
        %v572 = vld [vmem:[%s571] sm:$0xff]
        %v573 = vadd.f32 %v525, %v572
        %v574 = vadd.f32 %v573, %v566
        %s575 = scalar_lea.vmem %s270, 4 [#allocation3]
        %576 = vst [vmem:[%s575] sm:$0xf] %v529
        %v577 = vmul.f32 %v530, 0.9
        %v578 = vmul.f32 %v574, 0.1
        %v579 = vadd.f32 %v577, %v578
        %v580 = vmul.f32 %v574, 0.8
        %vm581 = vcmp.gt.f32.partialorder %v579, 1.0
        %v582 = vsel %vm581, 1, 0
        %v583 = vcvt.s32.f32 %v582
        %v584 = vpack.c.bf16 %v583, %v583
        %v585 = vsel %vm581, 0.0, %v579
        %586 = vmatprep.subr.bf16.mxu0 0
        %587 = vmatpush1.bf16.msra.mxu0 %v469
        %588 = vmatprep.subr.bf16.mxu0 0
        %589 = vmatpush1.bf16.msra.mxu0 %v468
        %590 = vmatprep.subr.bf16.mxu0 0
        %591 = vmatpush1.bf16.msra.mxu0 %v467
        %592 = vmatprep.subr.bf16.mxu0 0
        %593 = vmatpush1.bf16.msra.mxu0 %v466
        %594 = vmatprep.subr.bf16.mxu0 0
        %595 = vmatpush1.bf16.msra.mxu0 %v465
        %596 = vmatprep.subr.bf16.mxu0 0
        %597 = vmatpush1.bf16.msra.mxu0 %v464
        %598 = vmatprep.subr.bf16.mxu0 0
        %599 = vmatpush1.bf16.msra.mxu0 %v463
        %600 = vmatprep.subr.bf16.mxu0 0
        %601 = vmatpush1.bf16.msra.mxu0 %v462
        %602 = vmatprep.subr.bf16.mxu0 0
        %603 = vmatpush2.bf16.msra.mxu0 0
        %604 = vmatprep.subr.bf16.mxu0 0
        %605 = vmatpush2.bf16.msra.mxu0 0
        %606 = vmatprep.subr.bf16.mxu0 0
        %607 = vmatpush2.bf16.msra.mxu0 0
        %608 = vmatprep.subr.bf16.mxu0 0
        %609 = vmatpush2.bf16.msra.mxu0 0
        %610 = vmatprep.subr.bf16.mxu0 0
        %611 = vmatpush2.bf16.msra.mxu0 0
        %612 = vmatprep.subr.bf16.mxu0 0
        %613 = vmatpush2.bf16.msra.mxu0 0
        %614 = vmatprep.subr.bf16.mxu0 0
        %615 = vmatpush2.bf16.msra.mxu0 0
        %616 = vmatprep.subr.bf16.mxu0 0
        %617 = vmatpush2.bf16.msra.mxu0 0
        %618 = vmatprep.mubr.bf16.mxu0 0
        %619 = vmatmul.mubr.bf16.gmra.mxu0 %v529
        %v620 = vpop.f32.mrf.mxu0
        %v621 = vadd.f32 0.0, %v620
        %v622 = vpop.f32.mrf.mxu0
        %v623 = vpop.f32.mrf.mxu0
        %v624 = vpop.f32.mrf.mxu0
        %625 = vdwg.mxu0
        %s626 = scalar_lea.vmem [#allocation2], 16
        %v627 = vld [vmem:[%s626] sm:$0xff]
        %v628 = vadd.f32 %v580, %v627
        %v629 = vadd.f32 %v628, %v621
        %s630 = scalar_lea.vmem %s270, 8 [#allocation3]
        %631 = vst [vmem:[%s630] sm:$0xf] %v584
        %v632 = vmul.f32 %v585, 0.9
        %v633 = vmul.f32 %v629, 0.1
        %v634 = vadd.f32 %v632, %v633
        %v635 = vmul.f32 %v629, 0.8
        %vm636 = vcmp.gt.f32.partialorder %v634, 1.0
        %v637 = vsel %vm636, 1, 0
        %v638 = vcvt.s32.f32 %v637
        %v639 = vpack.c.bf16 %v638, %v638
        %v640 = vsel %vm636, 0.0, %v634
        %641 = vmatprep.subr.bf16.mxu0 0
        %642 = vmatpush1.bf16.msra.mxu0 %v469
        %643 = vmatprep.subr.bf16.mxu0 0
        %644 = vmatpush1.bf16.msra.mxu0 %v468
        %645 = vmatprep.subr.bf16.mxu0 0
        %646 = vmatpush1.bf16.msra.mxu0 %v467
        %647 = vmatprep.subr.bf16.mxu0 0
        %648 = vmatpush1.bf16.msra.mxu0 %v466
        %649 = vmatprep.subr.bf16.mxu0 0
        %650 = vmatpush1.bf16.msra.mxu0 %v465
        %651 = vmatprep.subr.bf16.mxu0 0
        %652 = vmatpush1.bf16.msra.mxu0 %v464
        %653 = vmatprep.subr.bf16.mxu0 0
        %654 = vmatpush1.bf16.msra.mxu0 %v463
        %655 = vmatprep.subr.bf16.mxu0 0
        %656 = vmatpush1.bf16.msra.mxu0 %v462
        %657 = vmatprep.subr.bf16.mxu0 0
        %658 = vmatpush2.bf16.msra.mxu0 0
        %659 = vmatprep.subr.bf16.mxu0 0
        %660 = vmatpush2.bf16.msra.mxu0 0
        %661 = vmatprep.subr.bf16.mxu0 0
        %662 = vmatpush2.bf16.msra.mxu0 0
        %663 = vmatprep.subr.bf16.mxu0 0
        %664 = vmatpush2.bf16.msra.mxu0 0
        %665 = vmatprep.subr.bf16.mxu0 0
        %666 = vmatpush2.bf16.msra.mxu0 0
        %667 = vmatprep.subr.bf16.mxu0 0
        %668 = vmatpush2.bf16.msra.mxu0 0
        %669 = vmatprep.subr.bf16.mxu0 0
        %670 = vmatpush2.bf16.msra.mxu0 0
        %671 = vmatprep.subr.bf16.mxu0 0
        %672 = vmatpush2.bf16.msra.mxu0 0
        %673 = vmatprep.mubr.bf16.mxu0 0
        %674 = vmatmul.mubr.bf16.gmra.mxu0 %v584
        %v675 = vpop.f32.mrf.mxu0
        %v676 = vadd.f32 0.0, %v675
        %v677 = vpop.f32.mrf.mxu0
        %v678 = vpop.f32.mrf.mxu0
        %v679 = vpop.f32.mrf.mxu0
        %680 = vdwg.mxu0
        %s681 = scalar_lea.vmem [#allocation2], 24
        %v682 = vld [vmem:[%s681] sm:$0xff]
        %v683 = vadd.f32 %v635, %v682
        %v684 = vadd.f32 %v683, %v676
        %s685 = scalar_lea.vmem %s270, 12 [#allocation3]
        %686 = vst [vmem:[%s685] sm:$0xf] %v639
        %v687 = vmul.f32 %v640, 0.9
        %v688 = vmul.f32 %v684, 0.1
        %v689 = vadd.f32 %v687, %v688
        %v690 = vmul.f32 %v684, 0.8
        %vm691 = vcmp.gt.f32.partialorder %v689, 1.0
        %v692 = vsel %vm691, 1, 0
        %v693 = vcvt.s32.f32 %v692
        %v694 = vpack.c.bf16 %v693, %v693
        %v695 = vsel %vm691, 0.0, %v689
        %696 = vmatprep.subr.bf16.mxu0 0
        %697 = vmatpush1.bf16.msra.mxu0 %v469
        %698 = vmatprep.subr.bf16.mxu0 0
        %699 = vmatpush1.bf16.msra.mxu0 %v468
        %700 = vmatprep.subr.bf16.mxu0 0
        %701 = vmatpush1.bf16.msra.mxu0 %v467
        %702 = vmatprep.subr.bf16.mxu0 0
        %703 = vmatpush1.bf16.msra.mxu0 %v466
        %704 = vmatprep.subr.bf16.mxu0 0
        %705 = vmatpush1.bf16.msra.mxu0 %v465
        %706 = vmatprep.subr.bf16.mxu0 0
        %707 = vmatpush1.bf16.msra.mxu0 %v464
        %708 = vmatprep.subr.bf16.mxu0 0
        %709 = vmatpush1.bf16.msra.mxu0 %v463
        %710 = vmatprep.subr.bf16.mxu0 0
        %711 = vmatpush1.bf16.msra.mxu0 %v462
        %712 = vmatprep.subr.bf16.mxu0 0
        %713 = vmatpush2.bf16.msra.mxu0 0
        %714 = vmatprep.subr.bf16.mxu0 0
        %715 = vmatpush2.bf16.msra.mxu0 0
        %716 = vmatprep.subr.bf16.mxu0 0
        %717 = vmatpush2.bf16.msra.mxu0 0
        %718 = vmatprep.subr.bf16.mxu0 0
        %719 = vmatpush2.bf16.msra.mxu0 0
        %720 = vmatprep.subr.bf16.mxu0 0
        %721 = vmatpush2.bf16.msra.mxu0 0
        %722 = vmatprep.subr.bf16.mxu0 0
        %723 = vmatpush2.bf16.msra.mxu0 0
        %724 = vmatprep.subr.bf16.mxu0 0
        %725 = vmatpush2.bf16.msra.mxu0 0
        %726 = vmatprep.subr.bf16.mxu0 0
        %727 = vmatpush2.bf16.msra.mxu0 0
        %728 = vmatprep.mubr.bf16.mxu0 0
        %729 = vmatmul.mubr.bf16.gmra.mxu0 %v639
        %v730 = vpop.f32.mrf.mxu0
        %v731 = vadd.f32 0.0, %v730
        %v732 = vpop.f32.mrf.mxu0
        %v733 = vpop.f32.mrf.mxu0
        %v734 = vpop.f32.mrf.mxu0
        %735 = vdwg.mxu0
        %s736 = scalar_lea.vmem [#allocation2], 32
        %v737 = vld [vmem:[%s736] sm:$0xff]
        %v738 = vadd.f32 %v690, %v737
        %v739 = vadd.f32 %v738, %v731
        %s740 = scalar_lea.vmem %s270, 16 [#allocation3]
        %741 = vst [vmem:[%s740] sm:$0xf] %v694
        %v742 = vmul.f32 %v695, 0.9
        %v743 = vmul.f32 %v739, 0.1
        %v744 = vadd.f32 %v742, %v743
        %v745 = vmul.f32 %v739, 0.8
        %vm746 = vcmp.gt.f32.partialorder %v744, 1.0
        %v747 = vsel %vm746, 1, 0
        %v748 = vcvt.s32.f32 %v747
        %v749 = vpack.c.bf16 %v748, %v748
        %v750 = vsel %vm746, 0.0, %v744
        %751 = vmatprep.subr.bf16.mxu0 0
        %752 = vmatpush1.bf16.msra.mxu0 %v469
        %753 = vmatprep.subr.bf16.mxu0 0
        %754 = vmatpush1.bf16.msra.mxu0 %v468
        %755 = vmatprep.subr.bf16.mxu0 0
        %756 = vmatpush1.bf16.msra.mxu0 %v467
        %757 = vmatprep.subr.bf16.mxu0 0
        %758 = vmatpush1.bf16.msra.mxu0 %v466
        %759 = vmatprep.subr.bf16.mxu0 0
        %760 = vmatpush1.bf16.msra.mxu0 %v465
        %761 = vmatprep.subr.bf16.mxu0 0
        %762 = vmatpush1.bf16.msra.mxu0 %v464
        %763 = vmatprep.subr.bf16.mxu0 0
        %764 = vmatpush1.bf16.msra.mxu0 %v463
        %765 = vmatprep.subr.bf16.mxu0 0
        %766 = vmatpush1.bf16.msra.mxu0 %v462
        %767 = vmatprep.subr.bf16.mxu0 0
        %768 = vmatpush2.bf16.msra.mxu0 0
        %769 = vmatprep.subr.bf16.mxu0 0
        %770 = vmatpush2.bf16.msra.mxu0 0
        %771 = vmatprep.subr.bf16.mxu0 0
        %772 = vmatpush2.bf16.msra.mxu0 0
        %773 = vmatprep.subr.bf16.mxu0 0
        %774 = vmatpush2.bf16.msra.mxu0 0
        %775 = vmatprep.subr.bf16.mxu0 0
        %776 = vmatpush2.bf16.msra.mxu0 0
        %777 = vmatprep.subr.bf16.mxu0 0
        %778 = vmatpush2.bf16.msra.mxu0 0
        %779 = vmatprep.subr.bf16.mxu0 0
        %780 = vmatpush2.bf16.msra.mxu0 0
        %781 = vmatprep.subr.bf16.mxu0 0
        %782 = vmatpush2.bf16.msra.mxu0 0
        %783 = vmatprep.mubr.bf16.mxu0 0
        %784 = vmatmul.mubr.bf16.gmra.mxu0 %v694
        %v785 = vpop.f32.mrf.mxu0
        %v786 = vadd.f32 0.0, %v785
        %v787 = vpop.f32.mrf.mxu0
        %v788 = vpop.f32.mrf.mxu0
        %v789 = vpop.f32.mrf.mxu0
        %790 = vdwg.mxu0
        %s791 = scalar_lea.vmem [#allocation2], 40
        %v792 = vld [vmem:[%s791] sm:$0xff]
        %v793 = vadd.f32 %v745, %v792
        %v794 = vadd.f32 %v793, %v786
        %s795 = scalar_lea.vmem %s270, 20 [#allocation3]
        %796 = vst [vmem:[%s795] sm:$0xf] %v749
        %v797 = vmul.f32 %v750, 0.9
        %v798 = vmul.f32 %v794, 0.1
        %v799 = vadd.f32 %v797, %v798
        %v800 = vmul.f32 %v794, 0.8
        %vm801 = vcmp.gt.f32.partialorder %v799, 1.0
        %v802 = vsel %vm801, 1, 0
        %v803 = vcvt.s32.f32 %v802
        %v804 = vpack.c.bf16 %v803, %v803
        %v805 = vsel %vm801, 0.0, %v799
        %806 = vmatprep.subr.bf16.mxu0 0
        %807 = vmatpush1.bf16.msra.mxu0 %v469
        %808 = vmatprep.subr.bf16.mxu0 0
        %809 = vmatpush1.bf16.msra.mxu0 %v468
        %810 = vmatprep.subr.bf16.mxu0 0
        %811 = vmatpush1.bf16.msra.mxu0 %v467
        %812 = vmatprep.subr.bf16.mxu0 0
        %813 = vmatpush1.bf16.msra.mxu0 %v466
        %814 = vmatprep.subr.bf16.mxu0 0
        %815 = vmatpush1.bf16.msra.mxu0 %v465
        %816 = vmatprep.subr.bf16.mxu0 0
        %817 = vmatpush1.bf16.msra.mxu0 %v464
        %818 = vmatprep.subr.bf16.mxu0 0
        %819 = vmatpush1.bf16.msra.mxu0 %v463
        %820 = vmatprep.subr.bf16.mxu0 0
        %821 = vmatpush1.bf16.msra.mxu0 %v462
        %822 = vmatprep.subr.bf16.mxu0 0
        %823 = vmatpush2.bf16.msra.mxu0 0
        %824 = vmatprep.subr.bf16.mxu0 0
        %825 = vmatpush2.bf16.msra.mxu0 0
        %826 = vmatprep.subr.bf16.mxu0 0
        %827 = vmatpush2.bf16.msra.mxu0 0
        %828 = vmatprep.subr.bf16.mxu0 0
        %829 = vmatpush2.bf16.msra.mxu0 0
        %830 = vmatprep.subr.bf16.mxu0 0
        %831 = vmatpush2.bf16.msra.mxu0 0
        %832 = vmatprep.subr.bf16.mxu0 0
        %833 = vmatpush2.bf16.msra.mxu0 0
        %834 = vmatprep.subr.bf16.mxu0 0
        %835 = vmatpush2.bf16.msra.mxu0 0
        %836 = vmatprep.subr.bf16.mxu0 0
        %837 = vmatpush2.bf16.msra.mxu0 0
        %838 = vmatprep.mubr.bf16.mxu0 0
        %839 = vmatmul.mubr.bf16.gmra.mxu0 %v749
        %v840 = vpop.f32.mrf.mxu0
        %v841 = vadd.f32 0.0, %v840
        %v842 = vpop.f32.mrf.mxu0
        %v843 = vpop.f32.mrf.mxu0
        %v844 = vpop.f32.mrf.mxu0
        %845 = vdwg.mxu0
        %s846 = scalar_lea.vmem [#allocation2], 48
        %v847 = vld [vmem:[%s846] sm:$0xff]
        %v848 = vadd.f32 %v800, %v847
        %v849 = vadd.f32 %v848, %v841
        %s850 = scalar_lea.vmem %s270, 24 [#allocation3]
        %851 = vst [vmem:[%s850] sm:$0xf] %v804
        %v852 = vmul.f32 %v805, 0.9
        %v853 = vmul.f32 %v849, 0.1
        %v854 = vadd.f32 %v852, %v853
        %v855 = vmul.f32 %v849, 0.8
        %vm856 = vcmp.gt.f32.partialorder %v854, 1.0
        %v857 = vsel %vm856, 1, 0
        %v858 = vcvt.s32.f32 %v857
        %v859 = vpack.c.bf16 %v858, %v858
        %v860 = vsel %vm856, 0.0, %v854
        %861 = vmatprep.subr.bf16.mxu0 0
        %862 = vmatpush1.bf16.msra.mxu0 %v469
        %863 = vmatprep.subr.bf16.mxu0 0
        %864 = vmatpush1.bf16.msra.mxu0 %v468
        %865 = vmatprep.subr.bf16.mxu0 0
        %866 = vmatpush1.bf16.msra.mxu0 %v467
        %867 = vmatprep.subr.bf16.mxu0 0
        %868 = vmatpush1.bf16.msra.mxu0 %v466
        %869 = vmatprep.subr.bf16.mxu0 0
        %870 = vmatpush1.bf16.msra.mxu0 %v465
        %871 = vmatprep.subr.bf16.mxu0 0
        %872 = vmatpush1.bf16.msra.mxu0 %v464
        %873 = vmatprep.subr.bf16.mxu0 0
        %874 = vmatpush1.bf16.msra.mxu0 %v463
        %875 = vmatprep.subr.bf16.mxu0 0
        %876 = vmatpush1.bf16.msra.mxu0 %v462
        %877 = vmatprep.subr.bf16.mxu0 0
        %878 = vmatpush2.bf16.msra.mxu0 0
        %879 = vmatprep.subr.bf16.mxu0 0
        %880 = vmatpush2.bf16.msra.mxu0 0
        %881 = vmatprep.subr.bf16.mxu0 0
        %882 = vmatpush2.bf16.msra.mxu0 0
        %883 = vmatprep.subr.bf16.mxu0 0
        %884 = vmatpush2.bf16.msra.mxu0 0
        %885 = vmatprep.subr.bf16.mxu0 0
        %886 = vmatpush2.bf16.msra.mxu0 0
        %887 = vmatprep.subr.bf16.mxu0 0
        %888 = vmatpush2.bf16.msra.mxu0 0
        %889 = vmatprep.subr.bf16.mxu0 0
        %890 = vmatpush2.bf16.msra.mxu0 0
        %891 = vmatprep.subr.bf16.mxu0 0
        %892 = vmatpush2.bf16.msra.mxu0 0
        %893 = vmatprep.mubr.bf16.mxu0 0
        %894 = vmatmul.mubr.bf16.gmra.mxu0 %v804
        %v895 = vpop.f32.mrf.mxu0
        %v896 = vadd.f32 0.0, %v895
        %v897 = vpop.f32.mrf.mxu0
        %v898 = vpop.f32.mrf.mxu0
        %v899 = vpop.f32.mrf.mxu0
        %900 = vdwg.mxu0
        %s901 = scalar_lea.vmem [#allocation2], 56
        %v902 = vld [vmem:[%s901] sm:$0xff]
        %v903 = vadd.f32 %v855, %v902
        %v904 = vadd.f32 %v903, %v896
        %s905 = scalar_lea.vmem %s270, 28 [#allocation3]
        %906 = vst [vmem:[%s905] sm:$0xf] %v859
        %v907 = vunpack.c.l.bf16 %v859
        %908 = vst [vmem:[#allocation5] sm:$0xff] %v907
        %909 = vst [vmem:[#allocation7] sm:$0xff] %v860
        %910 = vst [vmem:[#allocation8] sm:$0xff] %v904
        %s911 = sand.u32 %s115, 1
        %s912 = scalar_lea.sflag [#allocation4], %s911
        %s913 = sand.u32 %s115, 1
        %s914 = smul.addr %s913, 32
        %s915 = scalar_lea.vmem [#allocation3], %s914
        // Predicated region
        $region37: #{tpu_custom_call.1} parent=31 // pred_check
          %p916 = pneg %p125
        $region38: #{tpu_custom_call.1} parent=31 // pred_check_branch
          %918 = sbr.rel (%p916) target = $region40
        $region39: #{tpu_custom_call.1} parent=31 // pred_region
          %s919 = smul.u32 8, %s28
          %s921 = ssub.s32 512, 512
          %922 = vsyncadd %s912, %s921
          %s923 = sadd.s32 %s27, %s919
          %s924 = smul.addr %s923, 64
          %s925 = scalar_lea.hbm %s3, %s924
          %s926 = sshll.u32 %s915, 4
          %s927 = int_to_ptr.vmem [resolvable:$true] %s926
          %932 = dma.vmem_to_hbm [thread:$0]  %s927, 512, %s925, %s912, 64, 64, 4
        $region40: #{tpu_custom_call.1} parent=31 // pred_fallthru
          _
        // Predicated region
        $region41: #{tpu_custom_call.1} parent=31 // pred_check
          %p933 = pneg %p151
        $region42: #{tpu_custom_call.1} parent=31 // pred_check_branch
          %935 = sbr.rel (%p933) target = $region44
        $region43: #{tpu_custom_call.1} parent=31 // pred_region
          %s937 = ssub.s32 128, 128
          %938 = vsyncadd [#allocation6], %s937
          %s939 = smul.addr %s27, 128
          %s940 = scalar_lea.hbm %s4, %s939
          %s942 = sshll.u32 [#allocation5], 4
          %s943 = int_to_ptr.vmem [resolvable:$true] %s942
          %945 = dma.vmem_to_hbm [thread:$0]  %s943, 128, %s940, [#allocation6]
        $region44: #{tpu_custom_call.1} parent=31 // pred_fallthru
          _
        // Predicated region
        $region45: #{tpu_custom_call.1} parent=31 // pred_check
          %p946 = pneg %p177
        $region46: #{tpu_custom_call.1} parent=31 // pred_check_branch
          %948 = sbr.rel (%p946) target = $region48
        $region47: #{tpu_custom_call.1} parent=31 // pred_region
          %s950 = ssub.s32 128, 128
          %951 = vsyncadd [#allocation6], %s950
          %s952 = smul.addr %s27, 128
          %s953 = scalar_lea.hbm %s5, %s952
          %s955 = sshll.u32 [#allocation7], 4
          %s956 = int_to_ptr.vmem [resolvable:$true] %s955
          %958 = dma.vmem_to_hbm [thread:$0]  %s956, 128, %s953, [#allocation6]
        $region48: #{tpu_custom_call.1} parent=31 // pred_fallthru
          _
        // Predicated region
        $region49: #{tpu_custom_call.1} parent=31 // pred_check
          %p959 = pneg %p203
        $region50: #{tpu_custom_call.1} parent=31 // pred_check_branch
          %961 = sbr.rel (%p959) target = $region52
        $region51: #{tpu_custom_call.1} parent=31 // pred_region
          %s963 = ssub.s32 128, 128
          %964 = vsyncadd [#allocation9], %s963
          %s965 = smul.addr %s27, 128
          %s966 = scalar_lea.hbm %s6, %s965
          %s968 = sshll.u32 [#allocation8], 4
          %s969 = int_to_ptr.vmem [resolvable:$true] %s968
          %971 = dma.vmem_to_hbm [thread:$0]  %s969, 128, %s966, [#allocation9]
        $region52: #{tpu_custom_call.1} parent=31 // pred_fallthru
          _
        // Predicated region
        $region53: #{tpu_custom_call.1} parent=31 // pred_check
          %p972 = pneg %p151
        $region54: #{tpu_custom_call.1} parent=31 // pred_check_branch
          %974 = sbr.rel (%p972) target = $region56
        $region55: #{tpu_custom_call.1} parent=31 // pred_region
          %975 = dma.done [#allocation6], 128
        $region56: #{tpu_custom_call.1} parent=31 // pred_fallthru
          _
        // Predicated region
        $region57: #{tpu_custom_call.1} parent=31 // pred_check
          %p976 = pneg %p177
        $region58: #{tpu_custom_call.1} parent=31 // pred_check_branch
          %978 = sbr.rel (%p976) target = $region60
        $region59: #{tpu_custom_call.1} parent=31 // pred_region
          %979 = dma.done [#allocation6], 128
        $region60: #{tpu_custom_call.1} parent=31 // pred_fallthru
          _
        // Predicated region
        $region61: #{tpu_custom_call.1} parent=31 // pred_check
          %p980 = pneg %p203
        $region62: #{tpu_custom_call.1} parent=31 // pred_check_branch
          %982 = sbr.rel (%p980) target = $region64
        $region63: #{tpu_custom_call.1} parent=31 // pred_region
          %983 = dma.done [#allocation9], 128
        $region64: #{tpu_custom_call.1} parent=31 // pred_fallthru
          _
      $region32: #{tpu_custom_call.1} parent=5 // pred_fallthru
        _
      %p984 = scmp.le.s32.totalorder 2, %s18
      // Predicated region
      $region65: #{tpu_custom_call.1} parent=5 // pred_check
        %p985 = pneg %p984
      $region66: #{tpu_custom_call.1} parent=5 // pred_check_branch
        %987 = sbr.rel (%p985) target = $region68
      $region67: #{tpu_custom_call.1} parent=5 // pred_region
        %s988 = ssub.s32 %s18, 2
        // Predicated region
        $region69: #{tpu_custom_call.1} parent=67 // pred_check
          %p989 = pneg %p131
        $region70: #{tpu_custom_call.1} parent=67 // pred_check_branch
          %991 = sbr.rel (%p989) target = $region72
        $region71: #{tpu_custom_call.1} parent=67 // pred_region
          %s992 = sand.u32 %s116, 1
          %s993 = scalar_lea.sflag [#allocation4], %s992
          %s994 = sand.u32 %s116, 1
          %s995 = smul.addr %s994, 32
          %s996 = scalar_lea.vmem [#allocation3], %s995
          %997 = dma.done %s993, 512
        $region72: #{tpu_custom_call.1} parent=67 // pred_fallthru
          _
      $region68: #{tpu_custom_call.1} parent=5 // pred_fallthru
        _
    $region6: #{tpu_custom_call.1} parent=1 // loop_footer
      %s22 = sadd.s32 1, %s18
    $region7: #{tpu_custom_call.1} parent=1 // loop_footer_branch
      %17 = sbr.rel target = $region3
    $region8: #{tpu_custom_call.1} parent=1 // loop_exit
      _
    %998 = vsyncpa [#allocation4], 1
    %s999 = scalar_lea.sflag [#allocation4], 1
    %1000 = vsyncpa %s999, 1
    %1001 = vsyncpa [#allocation6], 1
    %1002 = vsyncpa [#allocation9], 1

</llo_original>
